<compile_context>
chip_gen: v6e
topology: v6e:2x2x1
jax: 0.10.0
libtpu: 0.0.40
codegen_flags: <defaults>
</compile_context>

<pallas_src>
import jax
import jax.numpy as jnp
from jax.experimental import pallas as pl
from jax.experimental.pallas import tpu as pltpu

# --- synthetic model config (small shapes) -----------------------------------
B, S, H, F, V, NUM_LABELS = 2, 8, 32, 64, 100, 5   # batch, seq, hidden, ffn, vocab, labels
BS = B * S                                          # packed rows
# single-head attention (head_dim == H) keeps all in-kernel matmuls simple.

LABEL_MAP = {0: 'Extremely negative', 1: 'Slightly negative', 2: 'Neutral',
             3: 'Slightly positive', 4: 'Extremely positive'}


# --- in-kernel helpers (pure jnp, traced inside the Pallas body) --------------
def _layernorm(x, g, b, eps=1e-12):
    mu = jnp.mean(x, axis=-1, keepdims=True)
    var = jnp.mean((x - mu) ** 2, axis=-1, keepdims=True)
    return (x - mu) * jax.lax.rsqrt(var + eps) * g + b


def _softmax_last(x):
    z = x - jnp.max(x, axis=-1, keepdims=True)
    e = jnp.exp(z)
    # reciprocal on the EUP slot instead of a VALU divide (approx: fine for
    # argmax classification, probs won't bit-match an exact-softmax reference)
    return e * pl.reciprocal(jnp.sum(e, axis=-1, keepdims=True), approx=True)


def _mmb(a_bf16, b_bf16):
    # MXU matmul: bf16 operands (already cast by the caller), f32 accumulate
    return jnp.dot(a_bf16, b_bf16, preferred_element_type=jnp.float32)


# --- the fused kernel: encoder layer + pooler + classifier ---------------------
def sentiment_kernel(
    x_ref, attn_bias_ref, cls_sel_ref,
    embg_ref, embb_ref,
    wq_ref, bq_ref, wk_ref, bk_ref, wv_ref, bv_ref,
    wo_ref, bo_ref,
    ln1g_ref, ln1b_ref,
    w1_ref, b1_ref, w2_ref, b2_ref,
    ln2g_ref, ln2b_ref,
    wp_ref, bp_ref, wc_ref, bc_ref,
    logits_ref,
):
    scale = 1.0 / (H ** 0.5)

    # whole packed batch, all params read exactly once (no per-batch loop)
    x = x_ref[...]                                       # [BS, H] f32

    # embeddings LayerNorm over all B*S rows at once
    x = _layernorm(x, embg_ref[...], embb_ref[...])
    x_bf = x.astype(jnp.bfloat16)                        # cast once, reused 3x

    # separate Q/K/V projections (lane-aligned outputs, no sub-vreg slicing)
    q = _mmb(x_bf, wq_ref[...]) + bq_ref[...]            # [BS, H] f32
    k = _mmb(x_bf, wk_ref[...]) + bk_ref[...]
    v = _mmb(x_bf, wv_ref[...]) + bv_ref[...]

    # batched attention on [B, S, H] (leading-dim reshape is layout-preserving)
    qb = q.astype(jnp.bfloat16).reshape(B, S, H)
    kb = k.astype(jnp.bfloat16).reshape(B, S, H)
    vb = v.astype(jnp.bfloat16).reshape(B, S, H)

    # scores + precomputed additive pad-key bias (0 for tokens, -1e9 for pads)
    scores = jnp.einsum('bqd,bkd->bqk', qb, kb,
                        preferred_element_type=jnp.float32) * scale
    scores = scores + attn_bias_ref[...]                 # [B, S, S] f32
    p = _softmax_last(scores)
    ctx = jnp.einsum('bqk,bkd->bqd', p.astype(jnp.bfloat16), vb,
                     preferred_element_type=jnp.float32) # [B, S, H] f32
    ctx = ctx.reshape(BS, H)

    attn = _mmb(ctx.astype(jnp.bfloat16), wo_ref[...]) + bo_ref[...]

    h1 = _layernorm(x + attn, ln1g_ref[...], ln1b_ref[...])

    # feed-forward (GELU)
    ff = _mmb(h1.astype(jnp.bfloat16), w1_ref[...]) + b1_ref[...]   # [BS, F]
    # TODO(synk): HF BERT default is exact (erf) GELU; tanh approximation kept
    # here for Mosaic-lowering safety (tiny numerical difference).
    ff = jax.nn.gelu(ff, approximate=True)
    ff = _mmb(ff.astype(jnp.bfloat16), w2_ref[...]) + b2_ref[...]   # [BS, H]

    h2 = _layernorm(h1 + ff, ln2g_ref[...], ln2b_ref[...])

    # [CLS] extraction as a one-hot selector matmul (MXU) instead of B strided
    # row slices + concat (sublane gathers / relayouts).
    cls = _mmb(cls_sel_ref[...], h2.astype(jnp.bfloat16))           # [B, H] f32

    pooled = jnp.tanh(_mmb(cls.astype(jnp.bfloat16), wp_ref[...]) + bp_ref[...])
    logits = _mmb(pooled.astype(jnp.bfloat16), wc_ref[...]) + bc_ref[...]   # [B, 5]

    # single store of the whole output block
    logits_ref[...] = logits


# --- wrapper -------------------------------------------------------------------
def sentiment_forward(x_emb, attn_bias, cls_sel, kernel_params):
    inputs = (x_emb, attn_bias, cls_sel) + tuple(kernel_params)
    vmem = pl.BlockSpec(memory_space=pltpu.MemorySpace.VMEM)
    return pl.pallas_call(
        sentiment_kernel,
        out_shape=jax.ShapeDtypeStruct((B, NUM_LABELS), jnp.float32),
        in_specs=[vmem] * len(inputs),
        out_specs=vmem,
    )(*inputs)


# --- deterministic parameter init ----------------------------------------------
def init_params(key):
    ks = jax.random.split(key, 12)

    def w(k, shape, scale=0.02):
        # matmul weights stored in bf16 (MXU operands); accumulation stays f32
        return (scale * jax.random.normal(k, shape)).astype(jnp.bfloat16)

    word_emb = (0.02 * jax.random.normal(ks[0], (V, H))).astype(jnp.float32)
    pos_emb = (0.02 * jax.random.normal(ks[1], (S, H))).astype(jnp.float32)

    zeros = lambda d: jnp.zeros((1, d), jnp.float32)
    ones = lambda d: jnp.ones((1, d), jnp.float32)

    kernel_params = (
        ones(H), zeros(H),                               # embedding LayerNorm gamma/beta
        w(ks[2], (H, H)), zeros(H),                      # Wq, bq
        w(ks[3], (H, H)), zeros(H),                      # Wk, bk
        w(ks[4], (H, H)), zeros(H),                      # Wv, bv
        w(ks[5], (H, H)), zeros(H),                      # Wo, bo
        ones(H), zeros(H),                               # LayerNorm 1 gamma/beta
        w(ks[6], (H, F)), zeros(F),                      # FFN up
        w(ks[7], (F, H)), zeros(H),                      # FFN down
        ones(H), zeros(H),                               # LayerNorm 2 gamma/beta
        w(ks[8], (H, H)), zeros(H),                      # pooler
        w(ks[9], (H, NUM_LABELS)), zeros(NUM_LABELS),    # classifier
    )
    return word_emb, pos_emb, kernel_params


# --- main ----------------------------------------------------------------------
if __name__ == "__main__":
    key = jax.random.PRNGKey(0)
    k_param, k_ids = jax.random.split(key)

    word_emb, pos_emb, kernel_params = init_params(k_param)

    # synthetic "tokenized" batch: token ids + attention mask (2nd example padded)
    input_ids = jax.random.randint(k_ids, (B, S), 0, V)
    attention_mask = jnp.array([[1.0] * S,
                                [1.0] * (S - 3) + [0.0] * 3], dtype=jnp.float32)

    # glue (plain JAX, all trace-time-constant structure kept out of the kernel):
    #   embedding gather + positional embeddings, packed [B*S, H]
    x_emb = (word_emb[input_ids] + pos_emb[None, :, :]).astype(jnp.float32).reshape(BS, H)
    #   pad-key mask folded into an additive bias: 0.0 for tokens, -1e9 for pads
    attn_bias = ((attention_mask - 1.0) * 1e9).reshape(B, 1, S).astype(jnp.float32)
    #   one-hot [CLS]-row selector (rows 0, S, 2S, ...) for the in-kernel MXU gather
    cls_sel = jax.nn.one_hot(jnp.arange(B) * S, BS, dtype=jnp.bfloat16)      # [B, BS]

    logits = sentiment_forward(x_emb, attn_bias, cls_sel, kernel_params)
    jax.block_until_ready(logits)

    # mirrors `predict`: softmax -> argmax -> label.  Done host-side on the tiny
    # [B, 5] logits (argmax(softmax(x)) == argmax(x), so the kernel skips it).
    probs = jax.nn.softmax(logits, axis=-1)
    predicted = jnp.argmax(probs, axis=-1)
    _labels = [LABEL_MAP[int(c)] for c in predicted]

    assert logits.shape == (B, NUM_LABELS) and probs.shape == (B, NUM_LABELS)
    print("KERNEL_OK")
</pallas_src>

<mosaic_0001>
module attributes {stable_mosaic.version = 11 : i64} {
  func.func @sentiment_kernel(%arg0: memref<16x32xf32, #tpu.memory_space<vmem>>, %arg1: memref<2x1x8xf32, #tpu.memory_space<vmem>>, %arg2: memref<2x16xbf16, #tpu.memory_space<vmem>>, %arg3: memref<1x32xf32, #tpu.memory_space<vmem>>, %arg4: memref<1x32xf32, #tpu.memory_space<vmem>>, %arg5: memref<32x32xbf16, #tpu.memory_space<vmem>>, %arg6: memref<1x32xf32, #tpu.memory_space<vmem>>, %arg7: memref<32x32xbf16, #tpu.memory_space<vmem>>, %arg8: memref<1x32xf32, #tpu.memory_space<vmem>>, %arg9: memref<32x32xbf16, #tpu.memory_space<vmem>>, %arg10: memref<1x32xf32, #tpu.memory_space<vmem>>, %arg11: memref<32x32xbf16, #tpu.memory_space<vmem>>, %arg12: memref<1x32xf32, #tpu.memory_space<vmem>>, %arg13: memref<1x32xf32, #tpu.memory_space<vmem>>, %arg14: memref<1x32xf32, #tpu.memory_space<vmem>>, %arg15: memref<32x64xbf16, #tpu.memory_space<vmem>>, %arg16: memref<1x64xf32, #tpu.memory_space<vmem>>, %arg17: memref<64x32xbf16, #tpu.memory_space<vmem>>, %arg18: memref<1x32xf32, #tpu.memory_space<vmem>>, %arg19: memref<1x32xf32, #tpu.memory_space<vmem>>, %arg20: memref<1x32xf32, #tpu.memory_space<vmem>>, %arg21: memref<32x32xbf16, #tpu.memory_space<vmem>>, %arg22: memref<1x32xf32, #tpu.memory_space<vmem>>, %arg23: memref<32x5xbf16, #tpu.memory_space<vmem>>, %arg24: memref<1x5xf32, #tpu.memory_space<vmem>>, %arg25: memref<2x5xf32, #tpu.memory_space<vmem>>) attributes {dimension_semantics = [], scalar_prefetch = 0 : i64, scratch_operands = 0 : i64, tpu.core_type = #tpu.core_type<tc>} {
    %c0 = arith.constant 0 : index
    %c0_0 = arith.constant 0 : index
    %0 = vector.load %arg0[%c0, %c0_0] : memref<16x32xf32, #tpu.memory_space<vmem>>, vector<16x32xf32>
    %c0_1 = arith.constant 0 : index
    %c0_2 = arith.constant 0 : index
    %1 = vector.load %arg3[%c0_1, %c0_2] : memref<1x32xf32, #tpu.memory_space<vmem>>, vector<1x32xf32>
    %c0_3 = arith.constant 0 : index
    %c0_4 = arith.constant 0 : index
    %2 = vector.load %arg4[%c0_3, %c0_4] : memref<1x32xf32, #tpu.memory_space<vmem>>, vector<1x32xf32>
    %cst = arith.constant dense<0.000000e+00> : vector<16xf32>
    %3 = vector.multi_reduction <add>, %0, %cst [1] : vector<16x32xf32> to vector<16xf32>
    %4 = vector.shape_cast %3 : vector<16xf32> to vector<16x1xf32>
    %cst_5 = arith.constant 3.200000e+01 : f32
    %5 = vector.broadcast %cst_5 : f32 to vector<16x1xf32>
    %6 = arith.divf %4, %5 : vector<16x1xf32>
    %7 = vector.broadcast %6 : vector<16x1xf32> to vector<16x32xf32>
    %8 = arith.subf %0, %7 : vector<16x32xf32>
    %9 = arith.mulf %8, %8 : vector<16x32xf32>
    %cst_6 = arith.constant dense<0.000000e+00> : vector<16xf32>
    %10 = vector.multi_reduction <add>, %9, %cst_6 [1] : vector<16x32xf32> to vector<16xf32>
    %11 = vector.shape_cast %10 : vector<16xf32> to vector<16x1xf32>
    %cst_7 = arith.constant 3.200000e+01 : f32
    %12 = vector.broadcast %cst_7 : f32 to vector<16x1xf32>
    %13 = arith.divf %11, %12 : vector<16x1xf32>
    %14 = vector.broadcast %6 : vector<16x1xf32> to vector<16x32xf32>
    %15 = arith.subf %0, %14 : vector<16x32xf32>
    %cst_8 = arith.constant 9.99999996E-13 : f32
    %16 = vector.broadcast %cst_8 : f32 to vector<16x1xf32>
    %17 = arith.addf %13, %16 : vector<16x1xf32>
    %18 = math.rsqrt %17 : vector<16x1xf32>
    %19 = vector.broadcast %18 : vector<16x1xf32> to vector<16x32xf32>
    %20 = arith.mulf %15, %19 : vector<16x32xf32>
    %21 = vector.broadcast %1 : vector<1x32xf32> to vector<16x32xf32>
    %22 = arith.mulf %20, %21 : vector<16x32xf32>
    %23 = vector.broadcast %2 : vector<1x32xf32> to vector<16x32xf32>
    %24 = arith.addf %22, %23 : vector<16x32xf32>
    %25 = arith.truncf %24 : vector<16x32xf32> to vector<16x32xbf16>
    %c0_9 = arith.constant 0 : index
    %c0_10 = arith.constant 0 : index
    %26 = vector.load %arg5[%c0_9, %c0_10] : memref<32x32xbf16, #tpu.memory_space<vmem>>, vector<32x32xbf16>
    %cst_11 = arith.constant dense<0.000000e+00> : vector<16x32xf32>
    %27 = tpu.matmul %25, %26, %cst_11 {dimension_numbers = #tpu.dot_dimension_numbers<[1], [0], [0], [1], [0, 0, 1, 1], [], []>} : vector<16x32xbf16>, vector<32x32xbf16>, vector<16x32xf32> -> vector<16x32xf32>
    %c0_12 = arith.constant 0 : index
    %c0_13 = arith.constant 0 : index
    %28 = vector.load %arg6[%c0_12, %c0_13] : memref<1x32xf32, #tpu.memory_space<vmem>>, vector<1x32xf32>
    %29 = vector.broadcast %28 : vector<1x32xf32> to vector<16x32xf32>
    %30 = arith.addf %27, %29 : vector<16x32xf32>
    %c0_14 = arith.constant 0 : index
    %c0_15 = arith.constant 0 : index
    %31 = vector.load %arg7[%c0_14, %c0_15] : memref<32x32xbf16, #tpu.memory_space<vmem>>, vector<32x32xbf16>
    %cst_16 = arith.constant dense<0.000000e+00> : vector<16x32xf32>
    %32 = tpu.matmul %25, %31, %cst_16 {dimension_numbers = #tpu.dot_dimension_numbers<[1], [0], [0], [1], [0, 0, 1, 1], [], []>} : vector<16x32xbf16>, vector<32x32xbf16>, vector<16x32xf32> -> vector<16x32xf32>
    %c0_17 = arith.constant 0 : index
    %c0_18 = arith.constant 0 : index
    %33 = vector.load %arg8[%c0_17, %c0_18] : memref<1x32xf32, #tpu.memory_space<vmem>>, vector<1x32xf32>
    %34 = vector.broadcast %33 : vector<1x32xf32> to vector<16x32xf32>
    %35 = arith.addf %32, %34 : vector<16x32xf32>
    %c0_19 = arith.constant 0 : index
    %c0_20 = arith.constant 0 : index
    %36 = vector.load %arg9[%c0_19, %c0_20] : memref<32x32xbf16, #tpu.memory_space<vmem>>, vector<32x32xbf16>
    %cst_21 = arith.constant dense<0.000000e+00> : vector<16x32xf32>
    %37 = tpu.matmul %25, %36, %cst_21 {dimension_numbers = #tpu.dot_dimension_numbers<[1], [0], [0], [1], [0, 0, 1, 1], [], []>} : vector<16x32xbf16>, vector<32x32xbf16>, vector<16x32xf32> -> vector<16x32xf32>
    %c0_22 = arith.constant 0 : index
    %c0_23 = arith.constant 0 : index
    %38 = vector.load %arg10[%c0_22, %c0_23] : memref<1x32xf32, #tpu.memory_space<vmem>>, vector<1x32xf32>
    %39 = vector.broadcast %38 : vector<1x32xf32> to vector<16x32xf32>
    %40 = arith.addf %37, %39 : vector<16x32xf32>
    %41 = arith.truncf %30 : vector<16x32xf32> to vector<16x32xbf16>
    %42 = vector.shape_cast %41 : vector<16x32xbf16> to vector<2x8x32xbf16>
    %43 = arith.truncf %35 : vector<16x32xf32> to vector<16x32xbf16>
    %44 = vector.shape_cast %43 : vector<16x32xbf16> to vector<2x8x32xbf16>
    %45 = arith.truncf %40 : vector<16x32xf32> to vector<16x32xbf16>
    %46 = vector.shape_cast %45 : vector<16x32xbf16> to vector<2x8x32xbf16>
    "tpu.trace_start"() <{level = 10 : i32, message = "bqd,bkd->bqk"}> : () -> ()
    %cst_24 = arith.constant dense<0.000000e+00> : vector<2x8x8xf32>
    %47 = tpu.matmul %42, %44, %cst_24 {dimension_numbers = #tpu.dot_dimension_numbers<[2], [2], [1], [1], [0, 0, 0, 1, 1, 1], [0], [0]>} : vector<2x8x32xbf16>, vector<2x8x32xbf16>, vector<2x8x8xf32> -> vector<2x8x8xf32>
    "tpu.trace_stop"() : () -> ()
    %cst_25 = arith.constant 0.176776692 : f32
    %48 = vector.broadcast %cst_25 : f32 to vector<2x8x8xf32>
    %49 = arith.mulf %47, %48 : vector<2x8x8xf32>
    %c0_26 = arith.constant 0 : index
    %c0_27 = arith.constant 0 : index
    %c0_28 = arith.constant 0 : index
    %50 = vector.load %arg1[%c0_26, %c0_27, %c0_28] : memref<2x1x8xf32, #tpu.memory_space<vmem>>, vector<2x1x8xf32>
    %51 = vector.broadcast %50 : vector<2x1x8xf32> to vector<2x8x8xf32>
    %52 = arith.addf %49, %51 : vector<2x8x8xf32>
    %cst_29 = arith.constant dense<0xFF800000> : vector<2x8xf32>
    %53 = vector.multi_reduction <maximumf>, %52, %cst_29 [2] : vector<2x8x8xf32> to vector<2x8xf32>
    %54 = vector.shape_cast %53 : vector<2x8xf32> to vector<2x8x1xf32>
    %55 = vector.broadcast %54 : vector<2x8x1xf32> to vector<2x8x8xf32>
    %56 = arith.subf %52, %55 : vector<2x8x8xf32>
    %57 = math.exp %56 : vector<2x8x8xf32>
    %cst_30 = arith.constant dense<0.000000e+00> : vector<2x8xf32>
    %58 = vector.multi_reduction <add>, %57, %cst_30 [2] : vector<2x8x8xf32> to vector<2x8xf32>
    %59 = vector.shape_cast %58 : vector<2x8xf32> to vector<2x8x1xf32>
    %60 = tpu.reciprocal %59 {approx = true} : vector<2x8x1xf32> -> vector<2x8x1xf32>
    %61 = vector.broadcast %60 : vector<2x8x1xf32> to vector<2x8x8xf32>
    %62 = arith.mulf %57, %61 : vector<2x8x8xf32>
    %63 = arith.truncf %62 : vector<2x8x8xf32> to vector<2x8x8xbf16>
    "tpu.trace_start"() <{level = 10 : i32, message = "bqk,bkd->bqd"}> : () -> ()
    %cst_31 = arith.constant dense<0.000000e+00> : vector<2x8x32xf32>
    %64 = tpu.matmul %63, %46, %cst_31 {dimension_numbers = #tpu.dot_dimension_numbers<[2], [1], [1], [2], [0, 0, 0, 1, 1, 2], [0], [0]>} : vector<2x8x8xbf16>, vector<2x8x32xbf16>, vector<2x8x32xf32> -> vector<2x8x32xf32>
    "tpu.trace_stop"() : () -> ()
    %65 = vector.shape_cast %64 : vector<2x8x32xf32> to vector<16x32xf32>
    %66 = arith.truncf %65 : vector<16x32xf32> to vector<16x32xbf16>
    %c0_32 = arith.constant 0 : index
    %c0_33 = arith.constant 0 : index
    %67 = vector.load %arg11[%c0_32, %c0_33] : memref<32x32xbf16, #tpu.memory_space<vmem>>, vector<32x32xbf16>
    %cst_34 = arith.constant dense<0.000000e+00> : vector<16x32xf32>
    %68 = tpu.matmul %66, %67, %cst_34 {dimension_numbers = #tpu.dot_dimension_numbers<[1], [0], [0], [1], [0, 0, 1, 1], [], []>} : vector<16x32xbf16>, vector<32x32xbf16>, vector<16x32xf32> -> vector<16x32xf32>
    %c0_35 = arith.constant 0 : index
    %c0_36 = arith.constant 0 : index
    %69 = vector.load %arg12[%c0_35, %c0_36] : memref<1x32xf32, #tpu.memory_space<vmem>>, vector<1x32xf32>
    %70 = vector.broadcast %69 : vector<1x32xf32> to vector<16x32xf32>
    %71 = arith.addf %68, %70 : vector<16x32xf32>
    %72 = arith.addf %24, %71 : vector<16x32xf32>
    %c0_37 = arith.constant 0 : index
    %c0_38 = arith.constant 0 : index
    %73 = vector.load %arg13[%c0_37, %c0_38] : memref<1x32xf32, #tpu.memory_space<vmem>>, vector<1x32xf32>
    %c0_39 = arith.constant 0 : index
    %c0_40 = arith.constant 0 : index
    %74 = vector.load %arg14[%c0_39, %c0_40] : memref<1x32xf32, #tpu.memory_space<vmem>>, vector<1x32xf32>
    %cst_41 = arith.constant dense<0.000000e+00> : vector<16xf32>
    %75 = vector.multi_reduction <add>, %72, %cst_41 [1] : vector<16x32xf32> to vector<16xf32>
    %76 = vector.shape_cast %75 : vector<16xf32> to vector<16x1xf32>
    %cst_42 = arith.constant 3.200000e+01 : f32
    %77 = vector.broadcast %cst_42 : f32 to vector<16x1xf32>
    %78 = arith.divf %76, %77 : vector<16x1xf32>
    %79 = vector.broadcast %78 : vector<16x1xf32> to vector<16x32xf32>
    %80 = arith.subf %72, %79 : vector<16x32xf32>
    %81 = arith.mulf %80, %80 : vector<16x32xf32>
    %cst_43 = arith.constant dense<0.000000e+00> : vector<16xf32>
    %82 = vector.multi_reduction <add>, %81, %cst_43 [1] : vector<16x32xf32> to vector<16xf32>
    %83 = vector.shape_cast %82 : vector<16xf32> to vector<16x1xf32>
    %cst_44 = arith.constant 3.200000e+01 : f32
    %84 = vector.broadcast %cst_44 : f32 to vector<16x1xf32>
    %85 = arith.divf %83, %84 : vector<16x1xf32>
    %86 = vector.broadcast %78 : vector<16x1xf32> to vector<16x32xf32>
    %87 = arith.subf %72, %86 : vector<16x32xf32>
    %cst_45 = arith.constant 9.99999996E-13 : f32
    %88 = vector.broadcast %cst_45 : f32 to vector<16x1xf32>
    %89 = arith.addf %85, %88 : vector<16x1xf32>
    %90 = math.rsqrt %89 : vector<16x1xf32>
    %91 = vector.broadcast %90 : vector<16x1xf32> to vector<16x32xf32>
    %92 = arith.mulf %87, %91 : vector<16x32xf32>
    %93 = vector.broadcast %73 : vector<1x32xf32> to vector<16x32xf32>
    %94 = arith.mulf %92, %93 : vector<16x32xf32>
    %95 = vector.broadcast %74 : vector<1x32xf32> to vector<16x32xf32>
    %96 = arith.addf %94, %95 : vector<16x32xf32>
    %97 = arith.truncf %96 : vector<16x32xf32> to vector<16x32xbf16>
    %c0_46 = arith.constant 0 : index
    %c0_47 = arith.constant 0 : index
    %98 = vector.load %arg15[%c0_46, %c0_47] : memref<32x64xbf16, #tpu.memory_space<vmem>>, vector<32x64xbf16>
    %cst_48 = arith.constant dense<0.000000e+00> : vector<16x64xf32>
    %99 = tpu.matmul %97, %98, %cst_48 {dimension_numbers = #tpu.dot_dimension_numbers<[1], [0], [0], [1], [0, 0, 1, 1], [], []>} : vector<16x32xbf16>, vector<32x64xbf16>, vector<16x64xf32> -> vector<16x64xf32>
    %c0_49 = arith.constant 0 : index
    %c0_50 = arith.constant 0 : index
    %100 = vector.load %arg16[%c0_49, %c0_50] : memref<1x64xf32, #tpu.memory_space<vmem>>, vector<1x64xf32>
    %101 = vector.broadcast %100 : vector<1x64xf32> to vector<16x64xf32>
    %102 = arith.addf %99, %101 : vector<16x64xf32>
    %103 = arith.mulf %102, %102 : vector<16x64xf32>
    %104 = arith.mulf %102, %103 : vector<16x64xf32>
    %cst_51 = arith.constant 4.471500e-02 : f32
    %105 = vector.broadcast %cst_51 : f32 to vector<16x64xf32>
    %106 = arith.mulf %105, %104 : vector<16x64xf32>
    %107 = arith.addf %102, %106 : vector<16x64xf32>
    %cst_52 = arith.constant 0.797884583 : f32
    %108 = vector.broadcast %cst_52 : f32 to vector<16x64xf32>
    %109 = arith.mulf %108, %107 : vector<16x64xf32>
    %110 = math.tanh %109 : vector<16x64xf32>
    %cst_53 = arith.constant 1.000000e+00 : f32
    %111 = vector.broadcast %cst_53 : f32 to vector<16x64xf32>
    %112 = arith.addf %111, %110 : vector<16x64xf32>
    %cst_54 = arith.constant 5.000000e-01 : f32
    %113 = vector.broadcast %cst_54 : f32 to vector<16x64xf32>
    %114 = arith.mulf %113, %112 : vector<16x64xf32>
    %115 = arith.mulf %102, %114 : vector<16x64xf32>
    %116 = arith.truncf %115 : vector<16x64xf32> to vector<16x64xbf16>
    %c0_55 = arith.constant 0 : index
    %c0_56 = arith.constant 0 : index
    %117 = vector.load %arg17[%c0_55, %c0_56] : memref<64x32xbf16, #tpu.memory_space<vmem>>, vector<64x32xbf16>
    %cst_57 = arith.constant dense<0.000000e+00> : vector<16x32xf32>
    %118 = tpu.matmul %116, %117, %cst_57 {dimension_numbers = #tpu.dot_dimension_numbers<[1], [0], [0], [1], [0, 0, 1, 1], [], []>} : vector<16x64xbf16>, vector<64x32xbf16>, vector<16x32xf32> -> vector<16x32xf32>
    %c0_58 = arith.constant 0 : index
    %c0_59 = arith.constant 0 : index
    %119 = vector.load %arg18[%c0_58, %c0_59] : memref<1x32xf32, #tpu.memory_space<vmem>>, vector<1x32xf32>
    %120 = vector.broadcast %119 : vector<1x32xf32> to vector<16x32xf32>
    %121 = arith.addf %118, %120 : vector<16x32xf32>
    %122 = arith.addf %96, %121 : vector<16x32xf32>
    %c0_60 = arith.constant 0 : index
    %c0_61 = arith.constant 0 : index
    %123 = vector.load %arg19[%c0_60, %c0_61] : memref<1x32xf32, #tpu.memory_space<vmem>>, vector<1x32xf32>
    %c0_62 = arith.constant 0 : index
    %c0_63 = arith.constant 0 : index
    %124 = vector.load %arg20[%c0_62, %c0_63] : memref<1x32xf32, #tpu.memory_space<vmem>>, vector<1x32xf32>
    %cst_64 = arith.constant dense<0.000000e+00> : vector<16xf32>
    %125 = vector.multi_reduction <add>, %122, %cst_64 [1] : vector<16x32xf32> to vector<16xf32>
    %126 = vector.shape_cast %125 : vector<16xf32> to vector<16x1xf32>
    %cst_65 = arith.constant 3.200000e+01 : f32
    %127 = vector.broadcast %cst_65 : f32 to vector<16x1xf32>
    %128 = arith.divf %126, %127 : vector<16x1xf32>
    %129 = vector.broadcast %128 : vector<16x1xf32> to vector<16x32xf32>
    %130 = arith.subf %122, %129 : vector<16x32xf32>
    %131 = arith.mulf %130, %130 : vector<16x32xf32>
    %cst_66 = arith.constant dense<0.000000e+00> : vector<16xf32>
    %132 = vector.multi_reduction <add>, %131, %cst_66 [1] : vector<16x32xf32> to vector<16xf32>
    %133 = vector.shape_cast %132 : vector<16xf32> to vector<16x1xf32>
    %cst_67 = arith.constant 3.200000e+01 : f32
    %134 = vector.broadcast %cst_67 : f32 to vector<16x1xf32>
    %135 = arith.divf %133, %134 : vector<16x1xf32>
    %136 = vector.broadcast %128 : vector<16x1xf32> to vector<16x32xf32>
    %137 = arith.subf %122, %136 : vector<16x32xf32>
    %cst_68 = arith.constant 9.99999996E-13 : f32
    %138 = vector.broadcast %cst_68 : f32 to vector<16x1xf32>
    %139 = arith.addf %135, %138 : vector<16x1xf32>
    %140 = math.rsqrt %139 : vector<16x1xf32>
    %141 = vector.broadcast %140 : vector<16x1xf32> to vector<16x32xf32>
    %142 = arith.mulf %137, %141 : vector<16x32xf32>
    %143 = vector.broadcast %123 : vector<1x32xf32> to vector<16x32xf32>
    %144 = arith.mulf %142, %143 : vector<16x32xf32>
    %145 = vector.broadcast %124 : vector<1x32xf32> to vector<16x32xf32>
    %146 = arith.addf %144, %145 : vector<16x32xf32>
    %c0_69 = arith.constant 0 : index
    %c0_70 = arith.constant 0 : index
    %147 = vector.load %arg2[%c0_69, %c0_70] : memref<2x16xbf16, #tpu.memory_space<vmem>>, vector<2x16xbf16>
    %148 = arith.truncf %146 : vector<16x32xf32> to vector<16x32xbf16>
    %cst_71 = arith.constant dense<0.000000e+00> : vector<2x32xf32>
    %149 = tpu.matmul %147, %148, %cst_71 {dimension_numbers = #tpu.dot_dimension_numbers<[1], [0], [0], [1], [0, 0, 1, 1], [], []>} : vector<2x16xbf16>, vector<16x32xbf16>, vector<2x32xf32> -> vector<2x32xf32>
    %150 = arith.truncf %149 : vector<2x32xf32> to vector<2x32xbf16>
    %c0_72 = arith.constant 0 : index
    %c0_73 = arith.constant 0 : index
    %151 = vector.load %arg21[%c0_72, %c0_73] : memref<32x32xbf16, #tpu.memory_space<vmem>>, vector<32x32xbf16>
    %cst_74 = arith.constant dense<0.000000e+00> : vector<2x32xf32>
    %152 = tpu.matmul %150, %151, %cst_74 {dimension_numbers = #tpu.dot_dimension_numbers<[1], [0], [0], [1], [0, 0, 1, 1], [], []>} : vector<2x32xbf16>, vector<32x32xbf16>, vector<2x32xf32> -> vector<2x32xf32>
    %c0_75 = arith.constant 0 : index
    %c0_76 = arith.constant 0 : index
    %153 = vector.load %arg22[%c0_75, %c0_76] : memref<1x32xf32, #tpu.memory_space<vmem>>, vector<1x32xf32>
    %154 = vector.broadcast %153 : vector<1x32xf32> to vector<2x32xf32>
    %155 = arith.addf %152, %154 : vector<2x32xf32>
    %156 = math.tanh %155 : vector<2x32xf32>
    %157 = arith.truncf %156 : vector<2x32xf32> to vector<2x32xbf16>
    %c0_77 = arith.constant 0 : index
    %c0_78 = arith.constant 0 : index
    %158 = vector.load %arg23[%c0_77, %c0_78] : memref<32x5xbf16, #tpu.memory_space<vmem>>, vector<32x5xbf16>
    %cst_79 = arith.constant dense<0.000000e+00> : vector<2x5xf32>
    %159 = tpu.matmul %157, %158, %cst_79 {dimension_numbers = #tpu.dot_dimension_numbers<[1], [0], [0], [1], [0, 0, 1, 1], [], []>} : vector<2x32xbf16>, vector<32x5xbf16>, vector<2x5xf32> -> vector<2x5xf32>
    %c0_80 = arith.constant 0 : index
    %c0_81 = arith.constant 0 : index
    %160 = vector.load %arg24[%c0_80, %c0_81] : memref<1x5xf32, #tpu.memory_space<vmem>>, vector<1x5xf32>
    %161 = vector.broadcast %160 : vector<1x5xf32> to vector<2x5xf32>
    %162 = arith.addf %159, %161 : vector<2x5xf32>
    %c0_82 = arith.constant 0 : index
    %c0_83 = arith.constant 0 : index
    %163 = vector.load %arg25[%c0_82, %c0_83] : memref<2x5xf32, #tpu.memory_space<vmem>>, vector<2x5xf32>
    tpu.vector_store %arg25[%c0_82, %c0_83], %162 {strides = array<i32>} : memref<2x5xf32, #tpu.memory_space<vmem>>, vector<2x5xf32>,
    return
  }
}

</mosaic_0001>

<llo_original>
// kernel: tpu_custom_call.1
$region0: #{tpu_custom_call.1}
  #allocation0 [shape = 'u32[]', space=smem, size = 0x4, offset = 0x4, fixed_abs, tag = 'smem constant byte address 0x4 - core index']
  #allocation1 [shape = 'u32[144,128]{1,0:T(1,128)}', space=vmem, size = 0x12000, scoped, tag = 'internal scratch']
  %s0 = inlined_call_operand.vmem [shape: f32[16,32], index: 0, kind: input, shape index: {}]
  %s1 = inlined_call_operand.hbm [shape: f32[2,1,8], index: 1, kind: input, shape index: {}]
  %s2 = inlined_call_operand.hbm [shape: bf16[2,16], index: 2, kind: input, shape index: {}]
  %s3 = inlined_call_operand.hbm [shape: f32[1,32], index: 3, kind: input, shape index: {}]
  %s4 = inlined_call_operand.hbm [shape: f32[1,32], index: 4, kind: input, shape index: {}]
  %s5 = inlined_call_operand.vmem [shape: bf16[32,32], index: 5, kind: input, shape index: {}]
  %s6 = inlined_call_operand.hbm [shape: f32[1,32], index: 6, kind: input, shape index: {}]
  %s7 = inlined_call_operand.vmem [shape: bf16[32,32], index: 7, kind: input, shape index: {}]
  %s8 = inlined_call_operand.hbm [shape: f32[1,32], index: 8, kind: input, shape index: {}]
  %s9 = inlined_call_operand.vmem [shape: bf16[32,32], index: 9, kind: input, shape index: {}]
  %s10 = inlined_call_operand.hbm [shape: f32[1,32], index: 10, kind: input, shape index: {}]
  %s11 = inlined_call_operand.hbm [shape: bf16[32,32], index: 11, kind: input, shape index: {}]
  %s12 = inlined_call_operand.hbm [shape: f32[1,32], index: 12, kind: input, shape index: {}]
  %s13 = inlined_call_operand.hbm [shape: f32[1,32], index: 13, kind: input, shape index: {}]
  %s14 = inlined_call_operand.hbm [shape: f32[1,32], index: 14, kind: input, shape index: {}]
  %s15 = inlined_call_operand.hbm [shape: bf16[32,64], index: 15, kind: input, shape index: {}]
  %s16 = inlined_call_operand.hbm [shape: f32[1,64], index: 16, kind: input, shape index: {}]
  %s17 = inlined_call_operand.vmem [shape: bf16[64,32], index: 17, kind: input, shape index: {}]
  %s18 = inlined_call_operand.hbm [shape: f32[1,32], index: 18, kind: input, shape index: {}]
  %s19 = inlined_call_operand.vmem [shape: f32[1,32], index: 19, kind: input, shape index: {}]
  %s20 = inlined_call_operand.vmem [shape: f32[1,32], index: 20, kind: input, shape index: {}]
  %s21 = inlined_call_operand.vmem [shape: bf16[32,32], index: 21, kind: input, shape index: {}]
  %s22 = inlined_call_operand.vmem [shape: f32[1,32], index: 22, kind: input, shape index: {}]
  %s23 = inlined_call_operand.vmem [shape: bf16[32,5], index: 23, kind: input, shape index: {}]
  %s24 = inlined_call_operand.vmem [shape: f32[1,5], index: 24, kind: input, shape index: {}]
  %s25 = inlined_call_operand.hbm [shape: f32[2,5], index: 25, kind: output, shape index: {}]
  %s26 = sld [smem:[#allocation0]]
  $region166: #{tpu_custom_call.1} parent=0
    _
  %s28 = ssub.s32 1, %s26
  %s29 = scalar_select 0, %s28, %s26
  $region1: #{tpu_custom_call.1} parent=0
    #allocation2 [shape = 'u8[1024]{0}', space=vmem, size = 0x400, scoped, tag = 'input window, operand 1, single buffered']
    #allocation3 [shape = 's32[1]{0}', space=sflag, size = 0x4, scoped, tag = 'scoped memory for tpu_custom_call.1']
    #allocation4 [shape = 's32[1]{0}', space=sflag, size = 0x4, scoped, tag = 'scoped memory for tpu_custom_call.1']
    #allocation5 [shape = 'u8[512]{0}', space=vmem, size = 0x400, scoped, tag = 'input window, operand 2, single buffered']
    #allocation6 [shape = 's32[1]{0}', space=sflag, size = 0x4, scoped, tag = 'scoped memory for tpu_custom_call.1']
    #allocation7 [shape = 'u8[512]{0}', space=vmem, size = 0x400, scoped, tag = 'input window, operand 3, single buffered']
    #allocation8 [shape = 'u8[512]{0}', space=vmem, size = 0x400, scoped, tag = 'input window, operand 4, single buffered']
    #allocation9 [shape = 's32[1]{0}', space=sflag, size = 0x4, scoped, tag = 'scoped memory for tpu_custom_call.1']
    #allocation10 [shape = 'u8[512]{0}', space=vmem, size = 0x400, scoped, tag = 'input window, operand 6, single buffered']
    #allocation11 [shape = 'u8[512]{0}', space=vmem, size = 0x400, scoped, tag = 'input window, operand 8, single buffered']
    #allocation12 [shape = 's32[1]{0}', space=sflag, size = 0x4, scoped, tag = 'scoped memory for tpu_custom_call.1']
    #allocation13 [shape = 'u8[512]{0}', space=vmem, size = 0x400, scoped, tag = 'input window, operand 10, single buffered']
    #allocation14 [shape = 'u8[8192]{0}', space=vmem, size = 0x2000, scoped, tag = 'input window, operand 11, single buffered']
    #allocation15 [shape = 's32[1]{0}', space=sflag, size = 0x4, scoped, tag = 'scoped memory for tpu_custom_call.1']
    #allocation16 [shape = 'u8[512]{0}', space=vmem, size = 0x400, scoped, tag = 'input window, operand 12, single buffered']
    #allocation17 [shape = 'u8[512]{0}', space=vmem, size = 0x400, scoped, tag = 'input window, operand 13, single buffered']
    #allocation18 [shape = 's32[1]{0}', space=sflag, size = 0x4, scoped, tag = 'scoped memory for tpu_custom_call.1']
    #allocation19 [shape = 'u8[512]{0}', space=vmem, size = 0x400, scoped, tag = 'input window, operand 14, single buffered']
    #allocation20 [shape = 'u8[8192]{0}', space=vmem, size = 0x2000, scoped, tag = 'input window, operand 15, single buffered']
    #allocation21 [shape = 's32[1]{0}', space=sflag, size = 0x4, scoped, tag = 'scoped memory for tpu_custom_call.1']
    #allocation22 [shape = 'u8[512]{0}', space=vmem, size = 0x400, scoped, tag = 'input window, operand 16, single buffered']
    #allocation23 [shape = 'u8[512]{0}', space=vmem, size = 0x400, scoped, tag = 'input window, operand 18, single buffered']
    #allocation24 [shape = 's32[1]{0}', space=sflag, size = 0x4, scoped, tag = 'scoped memory for tpu_custom_call.1']
    #allocation25 [shape = 'u8[1024]{0}', space=vmem, size = 0x400, scoped, tag = 'output window, operand 0, single buffered']
    %30 = vsyncpa [#allocation3], 0
    %31 = vsyncpa [#allocation6], 0
    %32 = vsyncpa [#allocation9], 0
    %33 = vsyncpa [#allocation12], 0
    %34 = vsyncpa [#allocation15], 0
    %35 = vsyncpa [#allocation18], 0
    %36 = vsyncpa [#allocation21], 0
    %37 = vsyncpa [#allocation24], 0
    %38 = vsyncpa [#allocation4], 0
    // Predicated region
    $region2: #{tpu_custom_call.1} parent=1 // pred_check
      _
    $region3: #{tpu_custom_call.1} parent=1 // pred_check_branch
      %40 = sbr.rel (0) target = $region5
    $region4: #{tpu_custom_call.1} parent=1 // pred_region
      _
    $region5: #{tpu_custom_call.1} parent=1 // pred_fallthru
      _
    // Predicated region
    $region6: #{tpu_custom_call.1} parent=1 // pred_check
      _
    $region7: #{tpu_custom_call.1} parent=1 // pred_check_branch
      %42 = sbr.rel (0) target = $region9
    $region8: #{tpu_custom_call.1} parent=1 // pred_region
      %s44 = ssub.s32 32, 32
      %45 = vsyncadd [#allocation3], %s44
      %s46 = sshll.u32 [#allocation2], 4
      %s47 = int_to_ptr.vmem [resolvable:$true] %s46
      %52 = dma.hbm_to_vmem [thread:$0]  %s1, 32, %s47, [#allocation3], 16, 16, 1
    $region9: #{tpu_custom_call.1} parent=1 // pred_fallthru
      _
    // Predicated region
    $region10: #{tpu_custom_call.1} parent=1 // pred_check
      _
    $region11: #{tpu_custom_call.1} parent=1 // pred_check_branch
      %54 = sbr.rel (0) target = $region13
    $region12: #{tpu_custom_call.1} parent=1 // pred_region
      %s56 = ssub.s32 16, 16
      %57 = vsyncadd [#allocation6], %s56
      %s59 = sshll.u32 [#allocation5], 4
      %s60 = int_to_ptr.vmem [resolvable:$true] %s59
      %62 = dma.hbm_to_vmem [thread:$0]  %s2, 16, %s60, [#allocation6]
    $region13: #{tpu_custom_call.1} parent=1 // pred_fallthru
      _
    // Predicated region
    $region14: #{tpu_custom_call.1} parent=1 // pred_check
      _
    $region15: #{tpu_custom_call.1} parent=1 // pred_check_branch
      %64 = sbr.rel (0) target = $region17
    $region16: #{tpu_custom_call.1} parent=1 // pred_region
      %s66 = ssub.s32 16, 16
      %67 = vsyncadd [#allocation6], %s66
      %s69 = sshll.u32 [#allocation7], 4
      %s70 = int_to_ptr.vmem [resolvable:$true] %s69
      %72 = dma.hbm_to_vmem [thread:$0]  %s3, 16, %s70, [#allocation6]
    $region17: #{tpu_custom_call.1} parent=1 // pred_fallthru
      _
    // Predicated region
    $region18: #{tpu_custom_call.1} parent=1 // pred_check
      _
    $region19: #{tpu_custom_call.1} parent=1 // pred_check_branch
      %74 = sbr.rel (0) target = $region21
    $region20: #{tpu_custom_call.1} parent=1 // pred_region
      %s76 = ssub.s32 16, 16
      %77 = vsyncadd [#allocation9], %s76
      %s79 = sshll.u32 [#allocation8], 4
      %s80 = int_to_ptr.vmem [resolvable:$true] %s79
      %82 = dma.hbm_to_vmem [thread:$0]  %s4, 16, %s80, [#allocation9]
    $region21: #{tpu_custom_call.1} parent=1 // pred_fallthru
      _
    // Predicated region
    $region22: #{tpu_custom_call.1} parent=1 // pred_check
      _
    $region23: #{tpu_custom_call.1} parent=1 // pred_check_branch
      %84 = sbr.rel (0) target = $region25
    $region24: #{tpu_custom_call.1} parent=1 // pred_region
      _
    $region25: #{tpu_custom_call.1} parent=1 // pred_fallthru
      _
    // Predicated region
    $region26: #{tpu_custom_call.1} parent=1 // pred_check
      _
    $region27: #{tpu_custom_call.1} parent=1 // pred_check_branch
      %86 = sbr.rel (0) target = $region29
    $region28: #{tpu_custom_call.1} parent=1 // pred_region
      %s88 = ssub.s32 16, 16
      %89 = vsyncadd [#allocation9], %s88
      %s91 = sshll.u32 [#allocation10], 4
      %s92 = int_to_ptr.vmem [resolvable:$true] %s91
      %94 = dma.hbm_to_vmem [thread:$0]  %s6, 16, %s92, [#allocation9]
    $region29: #{tpu_custom_call.1} parent=1 // pred_fallthru
      _
    // Predicated region
    $region30: #{tpu_custom_call.1} parent=1 // pred_check
      _
    $region31: #{tpu_custom_call.1} parent=1 // pred_check_branch
      %96 = sbr.rel (0) target = $region33
    $region32: #{tpu_custom_call.1} parent=1 // pred_region
      _
    $region33: #{tpu_custom_call.1} parent=1 // pred_fallthru
      _
    // Predicated region
    $region34: #{tpu_custom_call.1} parent=1 // pred_check
      _
    $region35: #{tpu_custom_call.1} parent=1 // pred_check_branch
      %98 = sbr.rel (0) target = $region37
    $region36: #{tpu_custom_call.1} parent=1 // pred_region
      %s100 = ssub.s32 16, 16
      %101 = vsyncadd [#allocation12], %s100
      %s103 = sshll.u32 [#allocation11], 4
      %s104 = int_to_ptr.vmem [resolvable:$true] %s103
      %106 = dma.hbm_to_vmem [thread:$0]  %s8, 16, %s104, [#allocation12]
    $region37: #{tpu_custom_call.1} parent=1 // pred_fallthru
      _
    // Predicated region
    $region38: #{tpu_custom_call.1} parent=1 // pred_check
      _
    $region39: #{tpu_custom_call.1} parent=1 // pred_check_branch
      %108 = sbr.rel (0) target = $region41
    $region40: #{tpu_custom_call.1} parent=1 // pred_region
      _
    $region41: #{tpu_custom_call.1} parent=1 // pred_fallthru
      _
    // Predicated region
    $region42: #{tpu_custom_call.1} parent=1 // pred_check
      _
    $region43: #{tpu_custom_call.1} parent=1 // pred_check_branch
      %110 = sbr.rel (0) target = $region45
    $region44: #{tpu_custom_call.1} parent=1 // pred_region
      %s112 = ssub.s32 16, 16
      %113 = vsyncadd [#allocation12], %s112
      %s115 = sshll.u32 [#allocation13], 4
      %s116 = int_to_ptr.vmem [resolvable:$true] %s115
      %118 = dma.hbm_to_vmem [thread:$0]  %s10, 16, %s116, [#allocation12]
    $region45: #{tpu_custom_call.1} parent=1 // pred_fallthru
      _
    // Predicated region
    $region46: #{tpu_custom_call.1} parent=1 // pred_check
      _
    $region47: #{tpu_custom_call.1} parent=1 // pred_check_branch
      %120 = sbr.rel (0) target = $region49
    $region48: #{tpu_custom_call.1} parent=1 // pred_region
      %s122 = ssub.s32 256, 256
      %123 = vsyncadd [#allocation15], %s122
      %s124 = sshll.u32 [#allocation14], 4
      %s125 = int_to_ptr.vmem [resolvable:$true] %s124
      %130 = dma.hbm_to_vmem [thread:$0]  %s11, 256, %s125, [#allocation15], 64, 64, 4
    $region49: #{tpu_custom_call.1} parent=1 // pred_fallthru
      _
    // Predicated region
    $region50: #{tpu_custom_call.1} parent=1 // pred_check
      _
    $region51: #{tpu_custom_call.1} parent=1 // pred_check_branch
      %132 = sbr.rel (0) target = $region53
    $region52: #{tpu_custom_call.1} parent=1 // pred_region
      %s134 = ssub.s32 16, 16
      %135 = vsyncadd [#allocation15], %s134
      %s137 = sshll.u32 [#allocation16], 4
      %s138 = int_to_ptr.vmem [resolvable:$true] %s137
      %140 = dma.hbm_to_vmem [thread:$0]  %s12, 16, %s138, [#allocation15]
    $region53: #{tpu_custom_call.1} parent=1 // pred_fallthru
      _
    // Predicated region
    $region54: #{tpu_custom_call.1} parent=1 // pred_check
      _
    $region55: #{tpu_custom_call.1} parent=1 // pred_check_branch
      %142 = sbr.rel (0) target = $region57
    $region56: #{tpu_custom_call.1} parent=1 // pred_region
      %s144 = ssub.s32 16, 16
      %145 = vsyncadd [#allocation18], %s144
      %s147 = sshll.u32 [#allocation17], 4
      %s148 = int_to_ptr.vmem [resolvable:$true] %s147
      %150 = dma.hbm_to_vmem [thread:$0]  %s13, 16, %s148, [#allocation18]
    $region57: #{tpu_custom_call.1} parent=1 // pred_fallthru
      _
    // Predicated region
    $region58: #{tpu_custom_call.1} parent=1 // pred_check
      _
    $region59: #{tpu_custom_call.1} parent=1 // pred_check_branch
      %152 = sbr.rel (0) target = $region61
    $region60: #{tpu_custom_call.1} parent=1 // pred_region
      %s154 = ssub.s32 16, 16
      %155 = vsyncadd [#allocation18], %s154
      %s157 = sshll.u32 [#allocation19], 4
      %s158 = int_to_ptr.vmem [resolvable:$true] %s157
      %160 = dma.hbm_to_vmem [thread:$0]  %s14, 16, %s158, [#allocation18]
    $region61: #{tpu_custom_call.1} parent=1 // pred_fallthru
      _
    // Predicated region
    $region62: #{tpu_custom_call.1} parent=1 // pred_check
      _
    $region63: #{tpu_custom_call.1} parent=1 // pred_check_branch
      %162 = sbr.rel (0) target = $region65
    $region64: #{tpu_custom_call.1} parent=1 // pred_region
      %s164 = ssub.s32 256, 256
      %165 = vsyncadd [#allocation21], %s164
      %s166 = sshll.u32 [#allocation20], 4
      %s167 = int_to_ptr.vmem [resolvable:$true] %s166
      %172 = dma.hbm_to_vmem [thread:$0]  %s15, 256, %s167, [#allocation21], 64, 64, 4
    $region65: #{tpu_custom_call.1} parent=1 // pred_fallthru
      _
    // Predicated region
    $region66: #{tpu_custom_call.1} parent=1 // pred_check
      _
    $region67: #{tpu_custom_call.1} parent=1 // pred_check_branch
      %174 = sbr.rel (0) target = $region69
    $region68: #{tpu_custom_call.1} parent=1 // pred_region
      %s176 = ssub.s32 16, 16
      %177 = vsyncadd [#allocation21], %s176
      %s179 = sshll.u32 [#allocation22], 4
      %s180 = int_to_ptr.vmem [resolvable:$true] %s179
      %182 = dma.hbm_to_vmem [thread:$0]  %s16, 16, %s180, [#allocation21]
    $region69: #{tpu_custom_call.1} parent=1 // pred_fallthru
      _
    // Predicated region
    $region70: #{tpu_custom_call.1} parent=1 // pred_check
      _
    $region71: #{tpu_custom_call.1} parent=1 // pred_check_branch
      %184 = sbr.rel (0) target = $region73
    $region72: #{tpu_custom_call.1} parent=1 // pred_region
      _
    $region73: #{tpu_custom_call.1} parent=1 // pred_fallthru
      _
    // Predicated region
    $region74: #{tpu_custom_call.1} parent=1 // pred_check
      _
    $region75: #{tpu_custom_call.1} parent=1 // pred_check_branch
      %186 = sbr.rel (0) target = $region77
    $region76: #{tpu_custom_call.1} parent=1 // pred_region
      %s188 = ssub.s32 16, 16
      %189 = vsyncadd [#allocation24], %s188
      %s191 = sshll.u32 [#allocation23], 4
      %s192 = int_to_ptr.vmem [resolvable:$true] %s191
      %194 = dma.hbm_to_vmem [thread:$0]  %s18, 16, %s192, [#allocation24]
    $region77: #{tpu_custom_call.1} parent=1 // pred_fallthru
      _
    // Predicated region
    $region78: #{tpu_custom_call.1} parent=1 // pred_check
      _
    $region79: #{tpu_custom_call.1} parent=1 // pred_check_branch
      %196 = sbr.rel (0) target = $region81
    $region80: #{tpu_custom_call.1} parent=1 // pred_region
      _
    $region81: #{tpu_custom_call.1} parent=1 // pred_fallthru
      _
    // Predicated region
    $region82: #{tpu_custom_call.1} parent=1 // pred_check
      _
    $region83: #{tpu_custom_call.1} parent=1 // pred_check_branch
      %198 = sbr.rel (0) target = $region85
    $region84: #{tpu_custom_call.1} parent=1 // pred_region
      _
    $region85: #{tpu_custom_call.1} parent=1 // pred_fallthru
      _
    // Predicated region
    $region86: #{tpu_custom_call.1} parent=1 // pred_check
      _
    $region87: #{tpu_custom_call.1} parent=1 // pred_check_branch
      %200 = sbr.rel (0) target = $region89
    $region88: #{tpu_custom_call.1} parent=1 // pred_region
      _
    $region89: #{tpu_custom_call.1} parent=1 // pred_fallthru
      _
    // Predicated region
    $region90: #{tpu_custom_call.1} parent=1 // pred_check
      _
    $region91: #{tpu_custom_call.1} parent=1 // pred_check_branch
      %202 = sbr.rel (0) target = $region93
    $region92: #{tpu_custom_call.1} parent=1 // pred_region
      _
    $region93: #{tpu_custom_call.1} parent=1 // pred_fallthru
      _
    // Predicated region
    $region94: #{tpu_custom_call.1} parent=1 // pred_check
      _
    $region95: #{tpu_custom_call.1} parent=1 // pred_check_branch
      %204 = sbr.rel (0) target = $region97
    $region96: #{tpu_custom_call.1} parent=1 // pred_region
      _
    $region97: #{tpu_custom_call.1} parent=1 // pred_fallthru
      _
    // Predicated region
    $region98: #{tpu_custom_call.1} parent=1 // pred_check
      _
    $region99: #{tpu_custom_call.1} parent=1 // pred_check_branch
      %206 = sbr.rel (0) target = $region101
    $region100: #{tpu_custom_call.1} parent=1 // pred_region
      _
    $region101: #{tpu_custom_call.1} parent=1 // pred_fallthru
      _
    // Predicated region
    $region102: #{tpu_custom_call.1} parent=1 // pred_check
      _
    $region103: #{tpu_custom_call.1} parent=1 // pred_check_branch
      %208 = sbr.rel (0) target = $region105
    $region104: #{tpu_custom_call.1} parent=1 // pred_region
      %209 = dma.done [#allocation3], 32
    $region105: #{tpu_custom_call.1} parent=1 // pred_fallthru
      _
    // Predicated region
    $region106: #{tpu_custom_call.1} parent=1 // pred_check
      _
    $region107: #{tpu_custom_call.1} parent=1 // pred_check_branch
      %211 = sbr.rel (0) target = $region109
    $region108: #{tpu_custom_call.1} parent=1 // pred_region
      %212 = dma.done [#allocation6], 16
    $region109: #{tpu_custom_call.1} parent=1 // pred_fallthru
      _
    // Predicated region
    $region110: #{tpu_custom_call.1} parent=1 // pred_check
      _
    $region111: #{tpu_custom_call.1} parent=1 // pred_check_branch
      %214 = sbr.rel (0) target = $region113
    $region112: #{tpu_custom_call.1} parent=1 // pred_region
      %215 = dma.done [#allocation6], 16
    $region113: #{tpu_custom_call.1} parent=1 // pred_fallthru
      _
    // Predicated region
    $region114: #{tpu_custom_call.1} parent=1 // pred_check
      _
    $region115: #{tpu_custom_call.1} parent=1 // pred_check_branch
      %217 = sbr.rel (0) target = $region117
    $region116: #{tpu_custom_call.1} parent=1 // pred_region
      %218 = dma.done [#allocation9], 16
    $region117: #{tpu_custom_call.1} parent=1 // pred_fallthru
      _
    // Predicated region
    $region118: #{tpu_custom_call.1} parent=1 // pred_check
      _
    $region119: #{tpu_custom_call.1} parent=1 // pred_check_branch
      %220 = sbr.rel (0) target = $region121
    $region120: #{tpu_custom_call.1} parent=1 // pred_region
      %221 = dma.done [#allocation9], 16
    $region121: #{tpu_custom_call.1} parent=1 // pred_fallthru
      _
    // Predicated region
    $region122: #{tpu_custom_call.1} parent=1 // pred_check
      _
    $region123: #{tpu_custom_call.1} parent=1 // pred_check_branch
      %223 = sbr.rel (0) target = $region125
    $region124: #{tpu_custom_call.1} parent=1 // pred_region
      %224 = dma.done [#allocation12], 16
    $region125: #{tpu_custom_call.1} parent=1 // pred_fallthru
      _
    // Predicated region
    $region126: #{tpu_custom_call.1} parent=1 // pred_check
      _
    $region127: #{tpu_custom_call.1} parent=1 // pred_check_branch
      %226 = sbr.rel (0) target = $region129
    $region128: #{tpu_custom_call.1} parent=1 // pred_region
      %227 = dma.done [#allocation12], 16
    $region129: #{tpu_custom_call.1} parent=1 // pred_fallthru
      _
    // Predicated region
    $region130: #{tpu_custom_call.1} parent=1 // pred_check
      _
    $region131: #{tpu_custom_call.1} parent=1 // pred_check_branch
      %229 = sbr.rel (0) target = $region133
    $region132: #{tpu_custom_call.1} parent=1 // pred_region
      %230 = dma.done [#allocation15], 256
    $region133: #{tpu_custom_call.1} parent=1 // pred_fallthru
      _
    // Predicated region
    $region134: #{tpu_custom_call.1} parent=1 // pred_check
      _
    $region135: #{tpu_custom_call.1} parent=1 // pred_check_branch
      %232 = sbr.rel (0) target = $region137
    $region136: #{tpu_custom_call.1} parent=1 // pred_region
      %233 = dma.done [#allocation15], 16
    $region137: #{tpu_custom_call.1} parent=1 // pred_fallthru
      _
    // Predicated region
    $region138: #{tpu_custom_call.1} parent=1 // pred_check
      _
    $region139: #{tpu_custom_call.1} parent=1 // pred_check_branch
      %235 = sbr.rel (0) target = $region141
    $region140: #{tpu_custom_call.1} parent=1 // pred_region
      %236 = dma.done [#allocation18], 16
    $region141: #{tpu_custom_call.1} parent=1 // pred_fallthru
      _
    // Predicated region
    $region142: #{tpu_custom_call.1} parent=1 // pred_check
      _
    $region143: #{tpu_custom_call.1} parent=1 // pred_check_branch
      %238 = sbr.rel (0) target = $region145
    $region144: #{tpu_custom_call.1} parent=1 // pred_region
      %239 = dma.done [#allocation18], 16
    $region145: #{tpu_custom_call.1} parent=1 // pred_fallthru
      _
    // Predicated region
    $region146: #{tpu_custom_call.1} parent=1 // pred_check
      _
    $region147: #{tpu_custom_call.1} parent=1 // pred_check_branch
      %241 = sbr.rel (0) target = $region149
    $region148: #{tpu_custom_call.1} parent=1 // pred_region
      %242 = dma.done [#allocation21], 256
    $region149: #{tpu_custom_call.1} parent=1 // pred_fallthru
      _
    // Predicated region
    $region150: #{tpu_custom_call.1} parent=1 // pred_check
      _
    $region151: #{tpu_custom_call.1} parent=1 // pred_check_branch
      %244 = sbr.rel (0) target = $region153
    $region152: #{tpu_custom_call.1} parent=1 // pred_region
      %245 = dma.done [#allocation21], 16
    $region153: #{tpu_custom_call.1} parent=1 // pred_fallthru
      _
    // Predicated region
    $region154: #{tpu_custom_call.1} parent=1 // pred_check
      _
    $region155: #{tpu_custom_call.1} parent=1 // pred_check_branch
      %247 = sbr.rel (0) target = $region157
    $region156: #{tpu_custom_call.1} parent=1 // pred_region
      %248 = dma.done [#allocation24], 16
    $region157: #{tpu_custom_call.1} parent=1 // pred_fallthru
      _
    %v250 = vld [vmem:[%s0] sm:$0xff]
    %v251 = vld [vmem:[%s0 + $0x8] sm:$0xff]
    %v252 = vld [vmem:[#allocation7] sm:$0x1]
    %v253 = vld [vmem:[#allocation8] sm:$0x1]
    %vm254 = vcmask 261120
    %v255 = vsel %vm254, %v250, 0.0
    %256 = vadd.xlane.f32.xlu0 %v255
    %v257 = vpop.xlane.xlu0 %256
    %v258 = vsel %vm254, %v251, 0.0
    %259 = vadd.xlane.f32.xlu0 %v258
    %v260 = vpop.xlane.xlu0 %259
    %v261 = vrcp.pop 32.0
    %v262 = vmul.f32 %v257, %v261
    %v263 = vmul.f32 %v260, %v261
    %v264 = vsub.f32 %v250, %v262
    %v265 = vsub.f32 %v251, %v263
    %v266 = vmul.f32 %v264, %v264
    %v267 = vmul.f32 %v265, %v265
    %v268 = vsel %vm254, %v266, 0.0
    %269 = vadd.xlane.f32.xlu0 %v268
    %v270 = vpop.xlane.xlu0 %269
    %v271 = vsel %vm254, %v267, 0.0
    %272 = vadd.xlane.f32.xlu0 %v271
    %v273 = vpop.xlane.xlu0 %272
    %v274 = vmul.f32 %v270, %v261
    %v275 = vmul.f32 %v273, %v261
    %v276 = vadd.f32 %v274, 1e-12
    %v277 = vadd.f32 %v275, 1e-12
    %v278 = vrsqrt.pop %v276
    %v279 = vrsqrt.pop %v277
    %v280 = vmul.f32 %v264, %v278
    %v281 = vmul.f32 %v265, %v279
    %v283 = vlaneseq
    %v284 = vshrl.u32 %v283, 7
    %v285 = vsub.s32 0, %v284
    %v286 = vrot.slane %v252, %v285
    %v288 = vmul.f32 %v280, %v286
    %v289 = vmul.f32 %v281, %v286
    %v291 = vlaneseq
    %v292 = vshrl.u32 %v291, 7
    %v293 = vsub.s32 0, %v292
    %v294 = vrot.slane %v253, %v293
    %v296 = vadd.f32 %v288, %v294
    %v297 = vadd.f32 %v289, %v294
    %v298 = vpack.c.bf16 %v297, %v296
    %v299 = vld [vmem:[%s5] sm:$0xf]
    %v300 = vld [vmem:[%s5 + $0x4] sm:$0xf]
    %v301 = vld [vmem:[%s5 + $0x8] sm:$0xf]
    %v302 = vld [vmem:[%s5 + $0xc] sm:$0xf]
    %v303 = vld [vmem:[#allocation10] sm:$0x1]
    %v305 = vlaneseq
    %v306 = vshrl.u32 %v305, 7
    %v307 = vsub.s32 0, %v306
    %v308 = vrot.slane %v303, %v307
    %v314 = vunpack.c.l.b16 %v299
    %v315 = vunpack.c.l.b16 %v300
    %v316 = vunpack.c.l.b16 %v301
    %v317 = vunpack.c.l.b16 %v302
    %v318 = vpack.c.b16 %v315, %v314
    %v319 = vpack.c.b16 %v317, %v316
    %v323 = vsel %vm254, %v298, 0
    %325 = vmatprep.subr.bf16.mxu0 0
    %326 = vmatpush1.bf16.msra.mxu0 0
    %327 = vmatprep.subr.bf16.mxu0 0
    %328 = vmatpush1.bf16.msra.mxu0 0
    %329 = vmatprep.subr.bf16.mxu0 0
    %330 = vmatpush1.bf16.msra.mxu0 0
    %331 = vmatprep.subr.bf16.mxu0 0
    %332 = vmatpush1.bf16.msra.mxu0 0
    %333 = vmatprep.subr.bf16.mxu0 0
    %334 = vmatpush1.bf16.msra.mxu0 0
    %335 = vmatprep.subr.bf16.mxu0 0
    %336 = vmatpush1.bf16.msra.mxu0 0
    %337 = vmatprep.subr.bf16.mxu0 0
    %338 = vmatpush1.bf16.msra.mxu0 %v319
    %339 = vmatprep.subr.bf16.mxu0 0
    %340 = vmatpush1.bf16.msra.mxu0 %v318
    %341 = vmatprep.subr.bf16.mxu0 0
    %342 = vmatpush2.bf16.msra.mxu0 0
    %343 = vmatprep.subr.bf16.mxu0 0
    %344 = vmatpush2.bf16.msra.mxu0 0
    %345 = vmatprep.subr.bf16.mxu0 0
    %346 = vmatpush2.bf16.msra.mxu0 0
    %347 = vmatprep.subr.bf16.mxu0 0
    %348 = vmatpush2.bf16.msra.mxu0 0
    %349 = vmatprep.subr.bf16.mxu0 0
    %350 = vmatpush2.bf16.msra.mxu0 0
    %351 = vmatprep.subr.bf16.mxu0 0
    %352 = vmatpush2.bf16.msra.mxu0 0
    %353 = vmatprep.subr.bf16.mxu0 0
    %354 = vmatpush2.bf16.msra.mxu0 0
    %355 = vmatprep.subr.bf16.mxu0 0
    %356 = vmatpush2.bf16.msra.mxu0 0
    %357 = vmatprep.mubr.bf16.mxu0 0
    %358 = vmatmul.mubr.bf16.gmra.mxu0 %v323
    %v359 = vpop.f32.mrf.mxu0
    %v360 = vadd.f32 %v308, %v359
    %v361 = vpop.f32.mrf.mxu0
    %v362 = vpop.f32.mrf.mxu0
    %v363 = vadd.f32 %v308, %v362
    %v364 = vpop.f32.mrf.mxu0
    %365 = vdwg.mxu0
    %v366 = vld [vmem:[%s7] sm:$0xf]
    %v367 = vld [vmem:[%s7 + $0x4] sm:$0xf]
    %v368 = vld [vmem:[%s7 + $0x8] sm:$0xf]
    %v369 = vld [vmem:[%s7 + $0xc] sm:$0xf]
    %v370 = vld [vmem:[#allocation11] sm:$0x1]
    %v372 = vlaneseq
    %v373 = vshrl.u32 %v372, 7
    %v374 = vsub.s32 0, %v373
    %v375 = vrot.slane %v370, %v374
    %v381 = vunpack.c.l.b16 %v366
    %v382 = vunpack.c.l.b16 %v367
    %v383 = vunpack.c.l.b16 %v368
    %v384 = vunpack.c.l.b16 %v369
    %v385 = vpack.c.b16 %v382, %v381
    %v386 = vpack.c.b16 %v384, %v383
    %389 = vmatprep.subr.bf16.mxu0 0
    %390 = vmatpush1.bf16.msra.mxu0 0
    %391 = vmatprep.subr.bf16.mxu0 0
    %392 = vmatpush1.bf16.msra.mxu0 0
    %393 = vmatprep.subr.bf16.mxu0 0
    %394 = vmatpush1.bf16.msra.mxu0 0
    %395 = vmatprep.subr.bf16.mxu0 0
    %396 = vmatpush1.bf16.msra.mxu0 0
    %397 = vmatprep.subr.bf16.mxu0 0
    %398 = vmatpush1.bf16.msra.mxu0 0
    %399 = vmatprep.subr.bf16.mxu0 0
    %400 = vmatpush1.bf16.msra.mxu0 0
    %401 = vmatprep.subr.bf16.mxu0 0
    %402 = vmatpush1.bf16.msra.mxu0 %v386
    %403 = vmatprep.subr.bf16.mxu0 0
    %404 = vmatpush1.bf16.msra.mxu0 %v385
    %405 = vmatprep.subr.bf16.mxu0 0
    %406 = vmatpush2.bf16.msra.mxu0 0
    %407 = vmatprep.subr.bf16.mxu0 0
    %408 = vmatpush2.bf16.msra.mxu0 0
    %409 = vmatprep.subr.bf16.mxu0 0
    %410 = vmatpush2.bf16.msra.mxu0 0
    %411 = vmatprep.subr.bf16.mxu0 0
    %412 = vmatpush2.bf16.msra.mxu0 0
    %413 = vmatprep.subr.bf16.mxu0 0
    %414 = vmatpush2.bf16.msra.mxu0 0
    %415 = vmatprep.subr.bf16.mxu0 0
    %416 = vmatpush2.bf16.msra.mxu0 0
    %417 = vmatprep.subr.bf16.mxu0 0
    %418 = vmatpush2.bf16.msra.mxu0 0
    %419 = vmatprep.subr.bf16.mxu0 0
    %420 = vmatpush2.bf16.msra.mxu0 0
    %421 = vmatprep.mubr.bf16.mxu0 0
    %422 = vmatmul.mubr.bf16.gmra.mxu0 %v323
    %v423 = vpop.f32.mrf.mxu0
    %v424 = vadd.f32 %v375, %v423
    %v425 = vpop.f32.mrf.mxu0
    %v426 = vpop.f32.mrf.mxu0
    %v427 = vadd.f32 %v375, %v426
    %v428 = vpop.f32.mrf.mxu0
    %429 = vdwg.mxu0
    %v430 = vld [vmem:[%s9] sm:$0xf]
    %v431 = vld [vmem:[%s9 + $0x4] sm:$0xf]
    %v432 = vld [vmem:[%s9 + $0x8] sm:$0xf]
    %v433 = vld [vmem:[%s9 + $0xc] sm:$0xf]
    %v434 = vld [vmem:[#allocation13] sm:$0x1]
    %v436 = vlaneseq
    %v437 = vshrl.u32 %v436, 7
    %v438 = vsub.s32 0, %v437
    %v439 = vrot.slane %v434, %v438
    %v445 = vunpack.c.l.b16 %v430
    %v446 = vunpack.c.l.b16 %v431
    %v447 = vunpack.c.l.b16 %v432
    %v448 = vunpack.c.l.b16 %v433
    %v449 = vpack.c.b16 %v446, %v445
    %v450 = vpack.c.b16 %v448, %v447
    %453 = vmatprep.subr.bf16.mxu0 0
    %454 = vmatpush1.bf16.msra.mxu0 0
    %455 = vmatprep.subr.bf16.mxu0 0
    %456 = vmatpush1.bf16.msra.mxu0 0
    %457 = vmatprep.subr.bf16.mxu0 0
    %458 = vmatpush1.bf16.msra.mxu0 0
    %459 = vmatprep.subr.bf16.mxu0 0
    %460 = vmatpush1.bf16.msra.mxu0 0
    %461 = vmatprep.subr.bf16.mxu0 0
    %462 = vmatpush1.bf16.msra.mxu0 0
    %463 = vmatprep.subr.bf16.mxu0 0
    %464 = vmatpush1.bf16.msra.mxu0 0
    %465 = vmatprep.subr.bf16.mxu0 0
    %466 = vmatpush1.bf16.msra.mxu0 %v450
    %467 = vmatprep.subr.bf16.mxu0 0
    %468 = vmatpush1.bf16.msra.mxu0 %v449
    %469 = vmatprep.subr.bf16.mxu0 0
    %470 = vmatpush2.bf16.msra.mxu0 0
    %471 = vmatprep.subr.bf16.mxu0 0
    %472 = vmatpush2.bf16.msra.mxu0 0
    %473 = vmatprep.subr.bf16.mxu0 0
    %474 = vmatpush2.bf16.msra.mxu0 0
    %475 = vmatprep.subr.bf16.mxu0 0
    %476 = vmatpush2.bf16.msra.mxu0 0
    %477 = vmatprep.subr.bf16.mxu0 0
    %478 = vmatpush2.bf16.msra.mxu0 0
    %479 = vmatprep.subr.bf16.mxu0 0
    %480 = vmatpush2.bf16.msra.mxu0 0
    %481 = vmatprep.subr.bf16.mxu0 0
    %482 = vmatpush2.bf16.msra.mxu0 0
    %483 = vmatprep.subr.bf16.mxu0 0
    %484 = vmatpush2.bf16.msra.mxu0 0
    %485 = vmatprep.mubr.bf16.mxu0 0
    %486 = vmatmul.mubr.bf16.gmra.mxu0 %v323
    %v487 = vpop.f32.mrf.mxu0
    %v488 = vadd.f32 %v439, %v487
    %v489 = vpop.f32.mrf.mxu0
    %v490 = vpop.f32.mrf.mxu0
    %v491 = vadd.f32 %v439, %v490
    %v492 = vpop.f32.mrf.mxu0
    %493 = vdwg.mxu0
    %v494 = vpack.c.bf16 %v363, %v360
    %v496 = vunpack.c.l.b16 %v494
    %v497 = vunpack.c.h.b16 %v494
    %v498 = vpack.c.b16 %v496, %v496
    %v499 = vpack.c.b16 %v497, %v497
    %v500 = vpack.c.bf16 %v427, %v424
    %v502 = vunpack.c.l.b16 %v500
    %v503 = vunpack.c.h.b16 %v500
    %v504 = vpack.c.b16 %v502, %v502
    %v505 = vpack.c.b16 %v503, %v503
    %v506 = vpack.c.bf16 %v491, %v488
    %v508 = vunpack.c.l.b16 %v506
    %v509 = vunpack.c.h.b16 %v506
    %v510 = vpack.c.b16 %v508, %v508
    %v511 = vpack.c.b16 %v509, %v509
    %v513 = vsel %vm254, %v498, 0
    %v516 = vsel %vm254, %v504, 0
    %518 = vmatprep.subr.bf16.mxu0 0
    %519 = vmatpush1.bf16.xpose.msra.mxu0 0
    %520 = vmatprep.subr.bf16.mxu0 0
    %521 = vmatpush1.bf16.xpose.msra.mxu0 0
    %522 = vmatprep.subr.bf16.mxu0 0
    %523 = vmatpush1.bf16.xpose.msra.mxu0 0
    %524 = vmatprep.subr.bf16.mxu0 0
    %525 = vmatpush1.bf16.xpose.msra.mxu0 0
    %526 = vmatprep.subr.bf16.mxu0 0
    %527 = vmatpush1.bf16.xpose.msra.mxu0 0
    %528 = vmatprep.subr.bf16.mxu0 0
    %529 = vmatpush1.bf16.xpose.msra.mxu0 0
    %530 = vmatprep.subr.bf16.mxu0 0
    %531 = vmatpush1.bf16.xpose.msra.mxu0 0
    %532 = vmatprep.subr.bf16.mxu0 0
    %533 = vmatpush1.bf16.xpose.msra.mxu0 %v516
    %534 = vmatprep.subr.bf16.mxu0 0
    %535 = vmatpush2.bf16.xpose.msra.mxu0 0
    %536 = vmatprep.subr.bf16.mxu0 0
    %537 = vmatpush2.bf16.xpose.msra.mxu0 0
    %538 = vmatprep.subr.bf16.mxu0 0
    %539 = vmatpush2.bf16.xpose.msra.mxu0 0
    %540 = vmatprep.subr.bf16.mxu0 0
    %541 = vmatpush2.bf16.xpose.msra.mxu0 0
    %542 = vmatprep.subr.bf16.mxu0 0
    %543 = vmatpush2.bf16.xpose.msra.mxu0 0
    %544 = vmatprep.subr.bf16.mxu0 0
    %545 = vmatpush2.bf16.xpose.msra.mxu0 0
    %546 = vmatprep.subr.bf16.mxu0 0
    %547 = vmatpush2.bf16.xpose.msra.mxu0 0
    %548 = vmatprep.subr.bf16.mxu0 0
    %549 = vmatpush2.bf16.xpose.msra.mxu0 0
    %550 = vmatprep.mubr.bf16.mxu0 0
    %551 = vmatmul.mubr.bf16.gmra.mxu0 %v513
    %v552 = vpop.f32.mrf.mxu0
    %v553 = vadd.f32 0.0, %v552
    %v554 = vpop.f32.mrf.mxu0
    %v555 = vpop.f32.mrf.mxu0
    %v556 = vpop.f32.mrf.mxu0
    %557 = vdwg.mxu0
    %v559 = vsel %vm254, %v499, 0
    %v562 = vsel %vm254, %v505, 0
    %564 = vmatprep.subr.bf16.mxu0 0
    %565 = vmatpush1.bf16.xpose.msra.mxu0 0
    %566 = vmatprep.subr.bf16.mxu0 0
    %567 = vmatpush1.bf16.xpose.msra.mxu0 0
    %568 = vmatprep.subr.bf16.mxu0 0
    %569 = vmatpush1.bf16.xpose.msra.mxu0 0
    %570 = vmatprep.subr.bf16.mxu0 0
    %571 = vmatpush1.bf16.xpose.msra.mxu0 0
    %572 = vmatprep.subr.bf16.mxu0 0
    %573 = vmatpush1.bf16.xpose.msra.mxu0 0
    %574 = vmatprep.subr.bf16.mxu0 0
    %575 = vmatpush1.bf16.xpose.msra.mxu0 0
    %576 = vmatprep.subr.bf16.mxu0 0
    %577 = vmatpush1.bf16.xpose.msra.mxu0 0
    %578 = vmatprep.subr.bf16.mxu0 0
    %579 = vmatpush1.bf16.xpose.msra.mxu0 %v562
    %580 = vmatprep.subr.bf16.mxu0 0
    %581 = vmatpush2.bf16.xpose.msra.mxu0 0
    %582 = vmatprep.subr.bf16.mxu0 0
    %583 = vmatpush2.bf16.xpose.msra.mxu0 0
    %584 = vmatprep.subr.bf16.mxu0 0
    %585 = vmatpush2.bf16.xpose.msra.mxu0 0
    %586 = vmatprep.subr.bf16.mxu0 0
    %587 = vmatpush2.bf16.xpose.msra.mxu0 0
    %588 = vmatprep.subr.bf16.mxu0 0
    %589 = vmatpush2.bf16.xpose.msra.mxu0 0
    %590 = vmatprep.subr.bf16.mxu0 0
    %591 = vmatpush2.bf16.xpose.msra.mxu0 0
    %592 = vmatprep.subr.bf16.mxu0 0
    %593 = vmatpush2.bf16.xpose.msra.mxu0 0
    %594 = vmatprep.subr.bf16.mxu0 0
    %595 = vmatpush2.bf16.xpose.msra.mxu0 0
    %596 = vmatprep.mubr.bf16.mxu0 0
    %597 = vmatmul.mubr.bf16.gmra.mxu0 %v559
    %v598 = vpop.f32.mrf.mxu0
    %v599 = vadd.f32 0.0, %v598
    %v600 = vpop.f32.mrf.mxu0
    %v601 = vpop.f32.mrf.mxu0
    %v602 = vpop.f32.mrf.mxu0
    %603 = vdwg.mxu0
    %v604 = vmul.f32 %v553, 0.17677669
    %v605 = vmul.f32 %v599, 0.17677669
    %v606 = vld [vmem:[#allocation2] sm:$0x1]
    %v607 = vld [vmem:[#allocation2 + $0x1] sm:$0x1]
    %v610 = vlaneseq
    %v611 = vshrl.u32 %v610, 7
    %v612 = vsub.s32 0, %v611
    %v613 = vrot.slane %v606, %v612
    %v614 = vlaneseq
    %v615 = vshrl.u32 %v614, 7
    %v616 = vsub.s32 0, %v615
    %v617 = vrot.slane %v607, %v616
    %v620 = vadd.f32 %v604, %v613
    %v621 = vadd.f32 %v605, %v617
    %vm622 = vcmask 64512
    %v623 = vsel %vm622, %v620, -inf
    %624 = vmax.xlane.f32.xlu0 %v623
    %v625 = vpop.xlane.xlu0 %624
    %v626 = vsel %vm622, %v621, -inf
    %627 = vmax.xlane.f32.xlu0 %v626
    %v628 = vpop.xlane.xlu0 %627
    %v629 = vsub.f32 %v620, %v625
    %v630 = vsub.f32 %v621, %v628
    %v631 = vmul.f32 %v629, 1.442695
    %v632 = vpow.pop %v631
    %v633 = vmul.f32 %v630, 1.442695
    %v634 = vpow.pop %v633
    %v635 = vsel %vm622, %v632, 0.0
    %636 = vadd.xlane.f32.xlu0 %v635
    %v637 = vpop.xlane.xlu0 %636
    %v638 = vsel %vm622, %v634, 0.0
    %639 = vadd.xlane.f32.xlu0 %v638
    %v640 = vpop.xlane.xlu0 %639
    %v641 = vrcp.pop %v637
    %v642 = vrcp.pop %v640
    %v643 = vmul.f32 %v632, %v641
    %v644 = vmul.f32 %v634, %v642
    %v645 = vpack.c.bf16 %v643, %v643
    %v646 = vpack.c.bf16 %v644, %v644
    %v648 = vsel %vm622, %v645, 0
    %vm650 = vcmask 1043456
    %v652 = vsel %vm650, %v510, 0
    %654 = vmatprep.subr.bf16.mxu0 0
    %655 = vmatpush1.bf16.msra.mxu0 0
    %656 = vmatprep.subr.bf16.mxu0 0
    %657 = vmatpush1.bf16.msra.mxu0 0
    %658 = vmatprep.subr.bf16.mxu0 0
    %659 = vmatpush1.bf16.msra.mxu0 0
    %660 = vmatprep.subr.bf16.mxu0 0
    %661 = vmatpush1.bf16.msra.mxu0 0
    %662 = vmatprep.subr.bf16.mxu0 0
    %663 = vmatpush1.bf16.msra.mxu0 0
    %664 = vmatprep.subr.bf16.mxu0 0
    %665 = vmatpush1.bf16.msra.mxu0 0
    %666 = vmatprep.subr.bf16.mxu0 0
    %667 = vmatpush1.bf16.msra.mxu0 0
    %668 = vmatprep.subr.bf16.mxu0 0
    %669 = vmatpush1.bf16.msra.mxu0 %v652
    %670 = vmatprep.subr.bf16.mxu0 0
    %671 = vmatpush2.bf16.msra.mxu0 0
    %672 = vmatprep.subr.bf16.mxu0 0
    %673 = vmatpush2.bf16.msra.mxu0 0
    %674 = vmatprep.subr.bf16.mxu0 0
    %675 = vmatpush2.bf16.msra.mxu0 0
    %676 = vmatprep.subr.bf16.mxu0 0
    %677 = vmatpush2.bf16.msra.mxu0 0
    %678 = vmatprep.subr.bf16.mxu0 0
    %679 = vmatpush2.bf16.msra.mxu0 0
    %680 = vmatprep.subr.bf16.mxu0 0
    %681 = vmatpush2.bf16.msra.mxu0 0
    %682 = vmatprep.subr.bf16.mxu0 0
    %683 = vmatpush2.bf16.msra.mxu0 0
    %684 = vmatprep.subr.bf16.mxu0 0
    %685 = vmatpush2.bf16.msra.mxu0 0
    %686 = vmatprep.mubr.bf16.mxu0 0
    %687 = vmatmul.mubr.bf16.gmra.mxu0 %v648
    %v688 = vpop.f32.mrf.mxu0
    %v689 = vadd.f32 0.0, %v688
    %v690 = vpop.f32.mrf.mxu0
    %v691 = vpop.f32.mrf.mxu0
    %v692 = vpop.f32.mrf.mxu0
    %693 = vdwg.mxu0
    %v695 = vsel %vm622, %v646, 0
    %v698 = vsel %vm650, %v511, 0
    %700 = vmatprep.subr.bf16.mxu0 0
    %701 = vmatpush1.bf16.msra.mxu0 0
    %702 = vmatprep.subr.bf16.mxu0 0
    %703 = vmatpush1.bf16.msra.mxu0 0
    %704 = vmatprep.subr.bf16.mxu0 0
    %705 = vmatpush1.bf16.msra.mxu0 0
    %706 = vmatprep.subr.bf16.mxu0 0
    %707 = vmatpush1.bf16.msra.mxu0 0
    %708 = vmatprep.subr.bf16.mxu0 0
    %709 = vmatpush1.bf16.msra.mxu0 0
    %710 = vmatprep.subr.bf16.mxu0 0
    %711 = vmatpush1.bf16.msra.mxu0 0
    %712 = vmatprep.subr.bf16.mxu0 0
    %713 = vmatpush1.bf16.msra.mxu0 0
    %714 = vmatprep.subr.bf16.mxu0 0
    %715 = vmatpush1.bf16.msra.mxu0 %v698
    %716 = vmatprep.subr.bf16.mxu0 0
    %717 = vmatpush2.bf16.msra.mxu0 0
    %718 = vmatprep.subr.bf16.mxu0 0
    %719 = vmatpush2.bf16.msra.mxu0 0
    %720 = vmatprep.subr.bf16.mxu0 0
    %721 = vmatpush2.bf16.msra.mxu0 0
    %722 = vmatprep.subr.bf16.mxu0 0
    %723 = vmatpush2.bf16.msra.mxu0 0
    %724 = vmatprep.subr.bf16.mxu0 0
    %725 = vmatpush2.bf16.msra.mxu0 0
    %726 = vmatprep.subr.bf16.mxu0 0
    %727 = vmatpush2.bf16.msra.mxu0 0
    %728 = vmatprep.subr.bf16.mxu0 0
    %729 = vmatpush2.bf16.msra.mxu0 0
    %730 = vmatprep.subr.bf16.mxu0 0
    %731 = vmatpush2.bf16.msra.mxu0 0
    %732 = vmatprep.mubr.bf16.mxu0 0
    %733 = vmatmul.mubr.bf16.gmra.mxu0 %v695
    %v734 = vpop.f32.mrf.mxu0
    %v735 = vadd.f32 0.0, %v734
    %v736 = vpop.f32.mrf.mxu0
    %v737 = vpop.f32.mrf.mxu0
    %v738 = vpop.f32.mrf.mxu0
    %739 = vdwg.mxu0
    %v740 = vpack.c.bf16 %v735, %v689
    %v741 = vld [vmem:[#allocation14] sm:$0xf]
    %v742 = vld [vmem:[#allocation14 + $0x4] sm:$0xf]
    %v743 = vld [vmem:[#allocation14 + $0x8] sm:$0xf]
    %v744 = vld [vmem:[#allocation14 + $0xc] sm:$0xf]
    %v745 = vld [vmem:[#allocation16] sm:$0x1]
    %v747 = vlaneseq
    %v748 = vshrl.u32 %v747, 7
    %v749 = vsub.s32 0, %v748
    %v750 = vrot.slane %v745, %v749
    %v756 = vunpack.c.l.b16 %v741
    %v757 = vunpack.c.l.b16 %v742
    %v758 = vunpack.c.l.b16 %v743
    %v759 = vunpack.c.l.b16 %v744
    %v760 = vpack.c.b16 %v757, %v756
    %v761 = vpack.c.b16 %v759, %v758
    %v765 = vsel %vm254, %v740, 0
    %767 = vmatprep.subr.bf16.mxu0 0
    %768 = vmatpush1.bf16.msra.mxu0 0
    %769 = vmatprep.subr.bf16.mxu0 0
    %770 = vmatpush1.bf16.msra.mxu0 0
    %771 = vmatprep.subr.bf16.mxu0 0
    %772 = vmatpush1.bf16.msra.mxu0 0
    %773 = vmatprep.subr.bf16.mxu0 0
    %774 = vmatpush1.bf16.msra.mxu0 0
    %775 = vmatprep.subr.bf16.mxu0 0
    %776 = vmatpush1.bf16.msra.mxu0 0
    %777 = vmatprep.subr.bf16.mxu0 0
    %778 = vmatpush1.bf16.msra.mxu0 0
    %779 = vmatprep.subr.bf16.mxu0 0
    %780 = vmatpush1.bf16.msra.mxu0 %v761
    %781 = vmatprep.subr.bf16.mxu0 0
    %782 = vmatpush1.bf16.msra.mxu0 %v760
    %783 = vmatprep.subr.bf16.mxu0 0
    %784 = vmatpush2.bf16.msra.mxu0 0
    %785 = vmatprep.subr.bf16.mxu0 0
    %786 = vmatpush2.bf16.msra.mxu0 0
    %787 = vmatprep.subr.bf16.mxu0 0
    %788 = vmatpush2.bf16.msra.mxu0 0
    %789 = vmatprep.subr.bf16.mxu0 0
    %790 = vmatpush2.bf16.msra.mxu0 0
    %791 = vmatprep.subr.bf16.mxu0 0
    %792 = vmatpush2.bf16.msra.mxu0 0
    %793 = vmatprep.subr.bf16.mxu0 0
    %794 = vmatpush2.bf16.msra.mxu0 0
    %795 = vmatprep.subr.bf16.mxu0 0
    %796 = vmatpush2.bf16.msra.mxu0 0
    %797 = vmatprep.subr.bf16.mxu0 0
    %798 = vmatpush2.bf16.msra.mxu0 0
    %799 = vmatprep.mubr.bf16.mxu0 0
    %800 = vmatmul.mubr.bf16.gmra.mxu0 %v765
    %v801 = vpop.f32.mrf.mxu0
    %v802 = vadd.f32 %v750, %v801
    %v803 = vpop.f32.mrf.mxu0
    %v804 = vpop.f32.mrf.mxu0
    %v805 = vadd.f32 %v750, %v804
    %v806 = vpop.f32.mrf.mxu0
    %807 = vdwg.mxu0
    %v808 = vadd.f32 %v296, %v802
    %v809 = vadd.f32 %v297, %v805
    %v810 = vld [vmem:[#allocation17] sm:$0x1]
    %v811 = vld [vmem:[#allocation19] sm:$0x1]
    %v812 = vsel %vm254, %v808, 0.0
    %813 = vadd.xlane.f32.xlu0 %v812
    %v814 = vpop.xlane.xlu0 %813
    %v815 = vsel %vm254, %v809, 0.0
    %816 = vadd.xlane.f32.xlu0 %v815
    %v817 = vpop.xlane.xlu0 %816
    %v818 = vmul.f32 %v814, %v261
    %v819 = vmul.f32 %v817, %v261
    %v820 = vsub.f32 %v808, %v818
    %v821 = vsub.f32 %v809, %v819
    %v822 = vmul.f32 %v820, %v820
    %v823 = vmul.f32 %v821, %v821
    %v824 = vsel %vm254, %v822, 0.0
    %825 = vadd.xlane.f32.xlu0 %v824
    %v826 = vpop.xlane.xlu0 %825
    %v827 = vsel %vm254, %v823, 0.0
    %828 = vadd.xlane.f32.xlu0 %v827
    %v829 = vpop.xlane.xlu0 %828
    %v830 = vmul.f32 %v826, %v261
    %v831 = vmul.f32 %v829, %v261
    %v832 = vadd.f32 %v830, 1e-12
    %v833 = vadd.f32 %v831, 1e-12
    %v834 = vrsqrt.pop %v832
    %v835 = vrsqrt.pop %v833
    %v836 = vmul.f32 %v820, %v834
    %v837 = vmul.f32 %v821, %v835
    %v839 = vlaneseq
    %v840 = vshrl.u32 %v839, 7
    %v841 = vsub.s32 0, %v840
    %v842 = vrot.slane %v810, %v841
    %v844 = vmul.f32 %v836, %v842
    %v845 = vmul.f32 %v837, %v842
    %v847 = vlaneseq
    %v848 = vshrl.u32 %v847, 7
    %v849 = vsub.s32 0, %v848
    %v850 = vrot.slane %v811, %v849
    %v852 = vadd.f32 %v844, %v850
    %v853 = vadd.f32 %v845, %v850
    %v854 = vpack.c.bf16 %v853, %v852
    %v855 = vld [vmem:[#allocation20] sm:$0xf]
    %v856 = vld [vmem:[#allocation20 + $0x4] sm:$0xf]
    %v857 = vld [vmem:[#allocation20 + $0x8] sm:$0xf]
    %v858 = vld [vmem:[#allocation20 + $0xc] sm:$0xf]
    %v859 = vld [vmem:[#allocation22] sm:$0x1]
    %v861 = vlaneseq
    %v862 = vshrl.u32 %v861, 7
    %v863 = vsub.s32 0, %v862
    %v864 = vrot.slane %v859, %v863
    %v870 = vunpack.c.l.b16 %v855
    %v871 = vunpack.c.l.b16 %v856
    %v872 = vunpack.c.l.b16 %v857
    %v873 = vunpack.c.l.b16 %v858
    %v874 = vpack.c.b16 %v871, %v870
    %v875 = vpack.c.b16 %v873, %v872
    %v879 = vsel %vm254, %v854, 0
    %881 = vmatprep.subr.bf16.mxu0 0
    %882 = vmatpush1.bf16.msra.mxu0 0
    %883 = vmatprep.subr.bf16.mxu0 0
    %884 = vmatpush1.bf16.msra.mxu0 0
    %885 = vmatprep.subr.bf16.mxu0 0
    %886 = vmatpush1.bf16.msra.mxu0 0
    %887 = vmatprep.subr.bf16.mxu0 0
    %888 = vmatpush1.bf16.msra.mxu0 0
    %889 = vmatprep.subr.bf16.mxu0 0
    %890 = vmatpush1.bf16.msra.mxu0 0
    %891 = vmatprep.subr.bf16.mxu0 0
    %892 = vmatpush1.bf16.msra.mxu0 0
    %893 = vmatprep.subr.bf16.mxu0 0
    %894 = vmatpush1.bf16.msra.mxu0 %v875
    %895 = vmatprep.subr.bf16.mxu0 0
    %896 = vmatpush1.bf16.msra.mxu0 %v874
    %897 = vmatprep.subr.bf16.mxu0 0
    %898 = vmatpush2.bf16.msra.mxu0 0
    %899 = vmatprep.subr.bf16.mxu0 0
    %900 = vmatpush2.bf16.msra.mxu0 0
    %901 = vmatprep.subr.bf16.mxu0 0
    %902 = vmatpush2.bf16.msra.mxu0 0
    %903 = vmatprep.subr.bf16.mxu0 0
    %904 = vmatpush2.bf16.msra.mxu0 0
    %905 = vmatprep.subr.bf16.mxu0 0
    %906 = vmatpush2.bf16.msra.mxu0 0
    %907 = vmatprep.subr.bf16.mxu0 0
    %908 = vmatpush2.bf16.msra.mxu0 0
    %909 = vmatprep.subr.bf16.mxu0 0
    %910 = vmatpush2.bf16.msra.mxu0 0
    %911 = vmatprep.subr.bf16.mxu0 0
    %912 = vmatpush2.bf16.msra.mxu0 0
    %913 = vmatprep.mubr.bf16.mxu0 0
    %914 = vmatmul.mubr.bf16.gmra.mxu0 %v879
    %v915 = vpop.f32.mrf.mxu0
    %v916 = vadd.f32 %v864, %v915
    %v917 = vpop.f32.mrf.mxu0
    %v918 = vpop.f32.mrf.mxu0
    %v919 = vadd.f32 %v864, %v918
    %v920 = vpop.f32.mrf.mxu0
    %921 = vdwg.mxu0
    %v922 = vmul.f32 %v916, %v916
    %v923 = vmul.f32 %v919, %v919
    %v924 = vmul.f32 %v916, %v922
    %v925 = vmul.f32 %v919, %v923
    %v926 = vmul.f32 %v924, 0.044715
    %v927 = vmul.f32 %v925, 0.044715
    %v928 = vadd.f32 %v916, %v926
    %v929 = vadd.f32 %v919, %v927
    %v930 = vmul.f32 %v928, 0.7978846
    %v931 = vmul.f32 %v929, 0.7978846
    %v932 = vtanh.pop %v930
    %v933 = vtanh.pop %v931
    %v934 = vadd.f32 %v932, 1.0
    %v935 = vadd.f32 %v933, 1.0
    %v936 = vmul.f32 %v934, 0.5
    %v937 = vmul.f32 %v935, 0.5
    %v938 = vmul.f32 %v916, %v936
    %v939 = vmul.f32 %v919, %v937
    %v940 = vpack.c.bf16 %v939, %v938
    %v941 = vld [vmem:[%s17] sm:$0xf]
    %v942 = vld [vmem:[%s17 + $0x4] sm:$0xf]
    %v943 = vld [vmem:[%s17 + $0x8] sm:$0xf]
    %v944 = vld [vmem:[%s17 + $0xc] sm:$0xf]
    %v945 = vld [vmem:[%s17 + $0x10] sm:$0xf]
    %v946 = vld [vmem:[%s17 + $0x14] sm:$0xf]
    %v947 = vld [vmem:[%s17 + $0x18] sm:$0xf]
    %v948 = vld [vmem:[%s17 + $0x1c] sm:$0xf]
    %v949 = vld [vmem:[#allocation23] sm:$0x1]
    %v951 = vlaneseq
    %v952 = vshrl.u32 %v951, 7
    %v953 = vsub.s32 0, %v952
    %v954 = vrot.slane %v949, %v953
    %v964 = vunpack.c.l.b16 %v941
    %v965 = vunpack.c.l.b16 %v942
    %v966 = vunpack.c.l.b16 %v943
    %v967 = vunpack.c.l.b16 %v944
    %v968 = vunpack.c.l.b16 %v945
    %v969 = vunpack.c.l.b16 %v946
    %v970 = vunpack.c.l.b16 %v947
    %v971 = vunpack.c.l.b16 %v948
    %v972 = vpack.c.b16 %v965, %v964
    %v973 = vpack.c.b16 %v967, %v966
    %v974 = vpack.c.b16 %v969, %v968
    %v975 = vpack.c.b16 %v971, %v970
    %vm980 = vcmask 523264
    %v982 = vsel %vm980, %v940, 0
    %984 = vmatprep.subr.bf16.mxu0 0
    %985 = vmatpush1.bf16.msra.mxu0 0
    %986 = vmatprep.subr.bf16.mxu0 0
    %987 = vmatpush1.bf16.msra.mxu0 0
    %988 = vmatprep.subr.bf16.mxu0 0
    %989 = vmatpush1.bf16.msra.mxu0 0
    %990 = vmatprep.subr.bf16.mxu0 0
    %991 = vmatpush1.bf16.msra.mxu0 0
    %992 = vmatprep.subr.bf16.mxu0 0
    %993 = vmatpush1.bf16.msra.mxu0 %v975
    %994 = vmatprep.subr.bf16.mxu0 0
    %995 = vmatpush1.bf16.msra.mxu0 %v974
    %996 = vmatprep.subr.bf16.mxu0 0
    %997 = vmatpush1.bf16.msra.mxu0 %v973
    %998 = vmatprep.subr.bf16.mxu0 0
    %999 = vmatpush1.bf16.msra.mxu0 %v972
    %1000 = vmatprep.subr.bf16.mxu0 0
    %1001 = vmatpush2.bf16.msra.mxu0 0
    %1002 = vmatprep.subr.bf16.mxu0 0
    %1003 = vmatpush2.bf16.msra.mxu0 0
    %1004 = vmatprep.subr.bf16.mxu0 0
    %1005 = vmatpush2.bf16.msra.mxu0 0
    %1006 = vmatprep.subr.bf16.mxu0 0
    %1007 = vmatpush2.bf16.msra.mxu0 0
    %1008 = vmatprep.subr.bf16.mxu0 0
    %1009 = vmatpush2.bf16.msra.mxu0 0
    %1010 = vmatprep.subr.bf16.mxu0 0
    %1011 = vmatpush2.bf16.msra.mxu0 0
    %1012 = vmatprep.subr.bf16.mxu0 0
    %1013 = vmatpush2.bf16.msra.mxu0 0
    %1014 = vmatprep.subr.bf16.mxu0 0
    %1015 = vmatpush2.bf16.msra.mxu0 0
    %1016 = vmatprep.mubr.bf16.mxu0 0
    %1017 = vmatmul.mubr.bf16.gmra.mxu0 %v982
    %v1018 = vpop.f32.mrf.mxu0
    %v1019 = vadd.f32 %v954, %v1018
    %v1020 = vpop.f32.mrf.mxu0
    %v1021 = vpop.f32.mrf.mxu0
    %v1022 = vadd.f32 %v954, %v1021
    %v1023 = vpop.f32.mrf.mxu0
    %1024 = vdwg.mxu0
    %v1025 = vadd.f32 %v852, %v1019
    %v1026 = vadd.f32 %v853, %v1022
    %v1027 = vld [vmem:[%s19] sm:$0x1]
    %v1028 = vld [vmem:[%s20] sm:$0x1]
    %v1029 = vsel %vm254, %v1025, 0.0
    %1030 = vadd.xlane.f32.xlu0 %v1029
    %v1031 = vpop.xlane.xlu0 %1030
    %v1032 = vsel %vm254, %v1026, 0.0
    %1033 = vadd.xlane.f32.xlu0 %v1032
    %v1034 = vpop.xlane.xlu0 %1033
    %v1035 = vmul.f32 %v1031, %v261
    %v1036 = vmul.f32 %v1034, %v261
    %v1037 = vsub.f32 %v1025, %v1035
    %v1038 = vsub.f32 %v1026, %v1036
    %v1039 = vmul.f32 %v1037, %v1037
    %v1040 = vmul.f32 %v1038, %v1038
    %v1041 = vsel %vm254, %v1039, 0.0
    %1042 = vadd.xlane.f32.xlu0 %v1041
    %v1043 = vpop.xlane.xlu0 %1042
    %v1044 = vsel %vm254, %v1040, 0.0
    %1045 = vadd.xlane.f32.xlu0 %v1044
    %v1046 = vpop.xlane.xlu0 %1045
    %v1047 = vmul.f32 %v1043, %v261
    %v1048 = vmul.f32 %v1046, %v261
    %v1049 = vadd.f32 %v1047, 1e-12
    %v1050 = vadd.f32 %v1048, 1e-12
    %v1051 = vrsqrt.pop %v1049
    %v1052 = vrsqrt.pop %v1050
    %v1053 = vmul.f32 %v1037, %v1051
    %v1054 = vmul.f32 %v1038, %v1052
    %v1056 = vlaneseq
    %v1057 = vshrl.u32 %v1056, 7
    %v1058 = vsub.s32 0, %v1057
    %v1059 = vrot.slane %v1027, %v1058
    %v1061 = vmul.f32 %v1053, %v1059
    %v1062 = vmul.f32 %v1054, %v1059
    %v1064 = vlaneseq
    %v1065 = vshrl.u32 %v1064, 7
    %v1066 = vsub.s32 0, %v1065
    %v1067 = vrot.slane %v1028, %v1066
    %v1069 = vadd.f32 %v1061, %v1067
    %v1070 = vadd.f32 %v1062, %v1067
    %v1071 = vld [vmem:[#allocation5] sm:$0x1]
    %v1072 = vpack.c.bf16 %v1070, %v1069
    %vm1073 = vcmask 130048
    %v1075 = vsel %vm1073, %v1071, 0
    %1077 = vmatprep.subr.bf16.mxu0 0
    %1078 = vmatpush1.bf16.msra.mxu0 0
    %1079 = vmatprep.subr.bf16.mxu0 0
    %1080 = vmatpush1.bf16.msra.mxu0 0
    %1081 = vmatprep.subr.bf16.mxu0 0
    %1082 = vmatpush1.bf16.msra.mxu0 0
    %1083 = vmatprep.subr.bf16.mxu0 0
    %1084 = vmatpush1.bf16.msra.mxu0 0
    %1085 = vmatprep.subr.bf16.mxu0 0
    %1086 = vmatpush1.bf16.msra.mxu0 0
    %1087 = vmatprep.subr.bf16.mxu0 0
    %1088 = vmatpush1.bf16.msra.mxu0 0
    %1089 = vmatprep.subr.bf16.mxu0 0
    %1090 = vmatpush1.bf16.msra.mxu0 0
    %1091 = vmatprep.subr.bf16.mxu0 0
    %1092 = vmatpush1.bf16.msra.mxu0 %v1072
    %1093 = vmatprep.subr.bf16.mxu0 0
    %1094 = vmatpush2.bf16.msra.mxu0 0
    %1095 = vmatprep.subr.bf16.mxu0 0
    %1096 = vmatpush2.bf16.msra.mxu0 0
    %1097 = vmatprep.subr.bf16.mxu0 0
    %1098 = vmatpush2.bf16.msra.mxu0 0
    %1099 = vmatprep.subr.bf16.mxu0 0
    %1100 = vmatpush2.bf16.msra.mxu0 0
    %1101 = vmatprep.subr.bf16.mxu0 0
    %1102 = vmatpush2.bf16.msra.mxu0 0
    %1103 = vmatprep.subr.bf16.mxu0 0
    %1104 = vmatpush2.bf16.msra.mxu0 0
    %1105 = vmatprep.subr.bf16.mxu0 0
    %1106 = vmatpush2.bf16.msra.mxu0 0
    %1107 = vmatprep.subr.bf16.mxu0 0
    %1108 = vmatpush2.bf16.msra.mxu0 0
    %1109 = vmatprep.mubr.bf16.mxu0 0
    %1110 = vmatmul.mubr.bf16.gmra.mxu0 %v1075
    %v1111 = vpop.f32.mrf.mxu0
    %v1112 = vadd.f32 0.0, %v1111
    %v1113 = vpop.f32.mrf.mxu0
    %v1114 = vpop.f32.mrf.mxu0
    %v1115 = vpop.f32.mrf.mxu0
    %1116 = vdwg.mxu0
    %v1117 = vpack.c.bf16 %v1112, %v1112
    %v1118 = vld [vmem:[%s21] sm:$0xf]
    %v1119 = vld [vmem:[%s21 + $0x4] sm:$0xf]
    %v1120 = vld [vmem:[%s21 + $0x8] sm:$0xf]
    %v1121 = vld [vmem:[%s21 + $0xc] sm:$0xf]
    %v1122 = vld [vmem:[%s22] sm:$0x1]
    %v1124 = vlaneseq
    %v1125 = vshrl.u32 %v1124, 7
    %v1126 = vsub.s32 0, %v1125
    %v1127 = vrot.slane %v1122, %v1126
    %v1133 = vunpack.c.l.b16 %v1118
    %v1134 = vunpack.c.l.b16 %v1119
    %v1135 = vunpack.c.l.b16 %v1120
    %v1136 = vunpack.c.l.b16 %v1121
    %v1137 = vpack.c.b16 %v1134, %v1133
    %v1138 = vpack.c.b16 %v1136, %v1135
    %v1142 = vsel %vm254, %v1117, 0
    %1144 = vmatprep.subr.bf16.mxu0 0
    %1145 = vmatpush1.bf16.msra.mxu0 0
    %1146 = vmatprep.subr.bf16.mxu0 0
    %1147 = vmatpush1.bf16.msra.mxu0 0
    %1148 = vmatprep.subr.bf16.mxu0 0
    %1149 = vmatpush1.bf16.msra.mxu0 0
    %1150 = vmatprep.subr.bf16.mxu0 0
    %1151 = vmatpush1.bf16.msra.mxu0 0
    %1152 = vmatprep.subr.bf16.mxu0 0
    %1153 = vmatpush1.bf16.msra.mxu0 0
    %1154 = vmatprep.subr.bf16.mxu0 0
    %1155 = vmatpush1.bf16.msra.mxu0 0
    %1156 = vmatprep.subr.bf16.mxu0 0
    %1157 = vmatpush1.bf16.msra.mxu0 %v1138
    %1158 = vmatprep.subr.bf16.mxu0 0
    %1159 = vmatpush1.bf16.msra.mxu0 %v1137
    %1160 = vmatprep.subr.bf16.mxu0 0
    %1161 = vmatpush2.bf16.msra.mxu0 0
    %1162 = vmatprep.subr.bf16.mxu0 0
    %1163 = vmatpush2.bf16.msra.mxu0 0
    %1164 = vmatprep.subr.bf16.mxu0 0
    %1165 = vmatpush2.bf16.msra.mxu0 0
    %1166 = vmatprep.subr.bf16.mxu0 0
    %1167 = vmatpush2.bf16.msra.mxu0 0
    %1168 = vmatprep.subr.bf16.mxu0 0
    %1169 = vmatpush2.bf16.msra.mxu0 0
    %1170 = vmatprep.subr.bf16.mxu0 0
    %1171 = vmatpush2.bf16.msra.mxu0 0
    %1172 = vmatprep.subr.bf16.mxu0 0
    %1173 = vmatpush2.bf16.msra.mxu0 0
    %1174 = vmatprep.subr.bf16.mxu0 0
    %1175 = vmatpush2.bf16.msra.mxu0 0
    %1176 = vmatprep.mubr.bf16.mxu0 0
    %1177 = vmatmul.mubr.bf16.gmra.mxu0 %v1142
    %v1178 = vpop.f32.mrf.mxu0
    %v1179 = vadd.f32 %v1127, %v1178
    %v1180 = vpop.f32.mrf.mxu0
    %v1181 = vpop.f32.mrf.mxu0
    %v1182 = vpop.f32.mrf.mxu0
    %1183 = vdwg.mxu0
    %v1184 = vtanh.pop %v1179
    %v1185 = vpack.c.bf16 %v1184, %v1184
    %v1186 = vld [vmem:[%s23] sm:$0xf]
    %v1187 = vld [vmem:[%s23 + $0x4] sm:$0xf]
    %v1188 = vld [vmem:[%s23 + $0x8] sm:$0xf]
    %v1189 = vld [vmem:[%s23 + $0xc] sm:$0xf]
    %v1190 = vld [vmem:[%s24] sm:$0x1]
    %v1192 = vlaneseq
    %v1193 = vshrl.u32 %v1192, 7
    %v1194 = vsub.s32 0, %v1193
    %v1195 = vrot.slane %v1190, %v1194
    %v1201 = vunpack.c.l.b16 %v1186
    %v1202 = vunpack.c.l.b16 %v1187
    %v1203 = vunpack.c.l.b16 %v1188
    %v1204 = vunpack.c.l.b16 %v1189
    %v1205 = vpack.c.b16 %v1202, %v1201
    %v1206 = vpack.c.b16 %v1204, %v1203
    %v1210 = vsel %vm254, %v1185, 0
    %1212 = vmatprep.subr.bf16.mxu0 0
    %1213 = vmatpush1.bf16.msra.mxu0 0
    %1214 = vmatprep.subr.bf16.mxu0 0
    %1215 = vmatpush1.bf16.msra.mxu0 0
    %1216 = vmatprep.subr.bf16.mxu0 0
    %1217 = vmatpush1.bf16.msra.mxu0 0
    %1218 = vmatprep.subr.bf16.mxu0 0
    %1219 = vmatpush1.bf16.msra.mxu0 0
    %1220 = vmatprep.subr.bf16.mxu0 0
    %1221 = vmatpush1.bf16.msra.mxu0 0
    %1222 = vmatprep.subr.bf16.mxu0 0
    %1223 = vmatpush1.bf16.msra.mxu0 0
    %1224 = vmatprep.subr.bf16.mxu0 0
    %1225 = vmatpush1.bf16.msra.mxu0 %v1206
    %1226 = vmatprep.subr.bf16.mxu0 0
    %1227 = vmatpush1.bf16.msra.mxu0 %v1205
    %1228 = vmatprep.subr.bf16.mxu0 0
    %1229 = vmatpush2.bf16.msra.mxu0 0
    %1230 = vmatprep.subr.bf16.mxu0 0
    %1231 = vmatpush2.bf16.msra.mxu0 0
    %1232 = vmatprep.subr.bf16.mxu0 0
    %1233 = vmatpush2.bf16.msra.mxu0 0
    %1234 = vmatprep.subr.bf16.mxu0 0
    %1235 = vmatpush2.bf16.msra.mxu0 0
    %1236 = vmatprep.subr.bf16.mxu0 0
    %1237 = vmatpush2.bf16.msra.mxu0 0
    %1238 = vmatprep.subr.bf16.mxu0 0
    %1239 = vmatpush2.bf16.msra.mxu0 0
    %1240 = vmatprep.subr.bf16.mxu0 0
    %1241 = vmatpush2.bf16.msra.mxu0 0
    %1242 = vmatprep.subr.bf16.mxu0 0
    %1243 = vmatpush2.bf16.msra.mxu0 0
    %1244 = vmatprep.mubr.bf16.mxu0 0
    %1245 = vmatmul.mubr.bf16.gmra.mxu0 %v1210
    %v1246 = vpop.f32.mrf.mxu0
    %v1247 = vadd.f32 %v1195, %v1246
    %v1248 = vpop.f32.mrf.mxu0
    %v1249 = vpop.f32.mrf.mxu0
    %v1250 = vpop.f32.mrf.mxu0
    %1251 = vdwg.mxu0
    %vm1252 = vcmask 33792
    %1253 = vst.msk [vmem:[#allocation25] sm:$0x3] %vm1252, %v1247
    // Predicated region
    $region158: #{tpu_custom_call.1} parent=1 // pred_check
      _
    $region159: #{tpu_custom_call.1} parent=1 // pred_check_branch
      %1255 = sbr.rel (0) target = $region161
    $region160: #{tpu_custom_call.1} parent=1 // pred_region
      %s1257 = ssub.s32 32, 32
      %1258 = vsyncadd [#allocation4], %s1257
      %s1260 = sshll.u32 [#allocation25], 4
      %s1261 = int_to_ptr.vmem [resolvable:$true] %s1260
      %1263 = dma.vmem_to_hbm [thread:$0]  %s1261, 32, %s25, [#allocation4]
    $region161: #{tpu_custom_call.1} parent=1 // pred_fallthru
      _
    // Predicated region
    $region162: #{tpu_custom_call.1} parent=1 // pred_check
      _
    $region163: #{tpu_custom_call.1} parent=1 // pred_check_branch
      %1265 = sbr.rel (0) target = $region165
    $region164: #{tpu_custom_call.1} parent=1 // pred_region
      %1266 = dma.done [#allocation4], 32
    $region165: #{tpu_custom_call.1} parent=1 // pred_fallthru
      _
    %1267 = vsyncpa [#allocation3], 1
    %1268 = vsyncpa [#allocation6], 1
    %1269 = vsyncpa [#allocation9], 1
    %1270 = vsyncpa [#allocation12], 1
    %1271 = vsyncpa [#allocation15], 1
    %1272 = vsyncpa [#allocation18], 1
    %1273 = vsyncpa [#allocation21], 1
    %1274 = vsyncpa [#allocation24], 1
    %1275 = vsyncpa [#allocation4], 1

</llo_original>
